<compile_context>
chip_gen: v7x
topology: tpu7x:2x2x1
jax: 0.10.0
libtpu: 0.0.40
codegen_flags: <defaults>
</compile_context>

<pallas_src>
import functools

import jax
import jax.numpy as jnp
from jax.experimental import pallas as pl
from jax.experimental.pallas import tpu as pltpu


# ---------------------------------------------------------------------------
# Pallas kernel: fused direct conv (shifted-slice GEMM taps) + BN affine + ReLU
#
# Per grid step (one batch image):
#   x_ref : (1, C_in, H_pad*W_pad)  padded input image, spatial dims flattened
#   w_ref : (KH*KW, C_out, C_in)    conv weight, one (C_out, C_in) tap per (dh,dw)
#   sc_ref: (C_out, 1)              BN scale = gamma / sqrt(running_var + eps)
#   sh_ref: (C_out, 1)              BN shift = beta - mean*scale + conv_bias*scale
#   o_ref : (1, C_out, M_flat)      output, flattened pixels on the lane axis
#
# The shifted "im2col" view for tap (dh, dw) is the static lane slice
#   x_flat[:, dh*W_pad + dw : dh*W_pad + dw + M_flat]
# because flattened padded pixels have row stride W_pad. Columns w >= W_out of
# each output row are wrap-around junk and are cropped by the wrapper.
# ---------------------------------------------------------------------------
def _conv_bn_relu_kernel(x_ref, w_ref, sc_ref, sh_ref, o_ref, *,
                         kh, kw, w_pad, m_flat):
    c_out = w_ref.shape[1]
    x = x_ref[0]                                      # (C_in, H_pad*W_pad)
    acc = jnp.zeros((c_out, m_flat), jnp.float32)     # f32 accumulator (C_out, M)
    for dh in range(kh):                              # static KH*KW tap loop
        for dw in range(kw):
            start = dh * w_pad + dw
            xk = x[:, start:start + m_flat]           # (C_in, M), static lane slice
            wk = w_ref[dh * kw + dw]                  # (C_out, C_in)
            acc = acc + jnp.dot(wk, xk, preferred_element_type=jnp.float32)
    y = acc * sc_ref[...] + sh_ref[...]               # BN affine (+ folded conv bias)
    o_ref[0] = jnp.maximum(y, 0.0).astype(o_ref.dtype)  # ReLU


def _conv_bn_relu_pallas(x_flat, w_taps, bn_scale, bn_shift, *,
                         kh, kw, w_pad, h_out, w_out):
    n, c_in, p_flat = x_flat.shape
    c_out = w_taps.shape[1]
    m_flat = (h_out - 1) * w_pad + w_out              # covers every valid output pixel

    kernel = functools.partial(
        _conv_bn_relu_kernel, kh=kh, kw=kw, w_pad=w_pad, m_flat=m_flat)

    itemsize = jnp.dtype(x_flat.dtype).itemsize
    cost = pl.CostEstimate(
        flops=2 * n * c_out * c_in * kh * kw * m_flat,
        transcendentals=0,
        bytes_accessed=(n * c_in * p_flat * itemsize
                        + kh * kw * c_out * c_in * itemsize
                        + n * c_out * m_flat * 4
                        + 2 * c_out * 4),
    )

    # NOTE: w_taps / scale / shift are grid-invariant and tiny here. At real
    # channel counts, single-buffer them (pipeline_mode=pl.Buffered(1)) or
    # K-tile the weight with an "arbitrary" grid axis + f32 VMEM accumulator to
    # respect v7x's 64 MiB VMEM; also tile H_out rows (with a KH-1 halo via
    # manual DMA) when C_in*H_pad*W_pad no longer fits VMEM.
    return pl.pallas_call(
        kernel,
        out_shape=jax.ShapeDtypeStruct((n, c_out, m_flat), jnp.float32),
        grid=(n,),
        in_specs=[
            pl.BlockSpec((1, c_in, p_flat), lambda i: (i, 0, 0)),       # per-image slab
            pl.BlockSpec((kh * kw, c_out, c_in), lambda i: (0, 0, 0)),  # weights (invariant)
            pl.BlockSpec((c_out, 1), lambda i: (0, 0)),                 # BN scale
            pl.BlockSpec((c_out, 1), lambda i: (0, 0)),                 # BN shift (+bias)
        ],
        out_specs=pl.BlockSpec((1, c_out, m_flat), lambda i: (i, 0, 0)),
        compiler_params=pltpu.CompilerParams(dimension_semantics=("parallel",)),
        cost_estimate=cost,
    )(x_flat, w_taps,
      bn_scale.reshape(c_out, 1), bn_shift.reshape(c_out, 1))


# ---------------------------------------------------------------------------
# Wrapper: NCHW in / NCHW out, BN folding, flatten/unflatten plumbing
# ---------------------------------------------------------------------------
@functools.partial(jax.jit, static_argnames=("kh", "kw", "padding", "compute_dtype"))
def custom_conv2d_forward(x, weight, conv_bias, gamma, beta, run_mean, run_var,
                          *, kh, kw, padding, eps=1e-5, compute_dtype=jnp.float32):
    # x: (N, C_in, H, W) NCHW.  weight: (C_out, C_in, kh, kw) (PyTorch OIHW).
    n, c_in, h, w = x.shape
    c_out = weight.shape[0]
    h_pad, w_pad = h + 2 * padding, w + 2 * padding
    h_out, w_out = h_pad - kh + 1, w_pad - kw + 1

    # Spatial zero-pad, then flatten (H_pad, W_pad) -> H_pad*W_pad. This is a
    # contiguous-dim merge (no transpose, no im2col materialization).
    x_pad = jnp.pad(x, ((0, 0), (0, 0), (padding, padding), (padding, padding)))
    x_flat = x_pad.reshape(n, c_in, h_pad * w_pad).astype(compute_dtype)

    # (C_out, C_in, kh, kw) -> (kh*kw, C_out, C_in): one GEMM tap per (dh, dw).
    # compute_dtype=jnp.bfloat16 halves HBM traffic / unlocks full MXU rate on
    # v6e/v7x if the accuracy budget allows (f32 accumulation is kept either way).
    w_taps = weight.transpose(2, 3, 0, 1).reshape(kh * kw, c_out, c_in)
    w_taps = w_taps.astype(compute_dtype)

    # Fold BatchNorm2d (eval / running stats) AND the conv bias into one affine.
    bn_scale = (gamma / jnp.sqrt(run_var + eps)).astype(jnp.float32)
    bn_shift = (beta - run_mean * bn_scale + conv_bias * bn_scale).astype(jnp.float32)

    out_flat = _conv_bn_relu_pallas(
        x_flat, w_taps, bn_scale, bn_shift,
        kh=kh, kw=kw, w_pad=w_pad, h_out=h_out, w_out=w_out)  # (N, C_out, M_flat)

    # Un-flatten: pad the tail up to a full H_out x W_pad raster, reshape (free),
    # crop the W_pad - W_out junk columns. Result is already NCHW.
    m_flat = out_flat.shape[-1]
    out_raster = jnp.pad(out_flat, ((0, 0), (0, 0), (0, h_out * w_pad - m_flat)))
    out = out_raster.reshape(n, c_out, h_out, w_pad)[:, :, :, :w_out]
    return out


# ---------------------------------------------------------------------------
# Pure-JAX reference (lax conv) for correctness check
# ---------------------------------------------------------------------------
def reference_forward(x, weight, conv_bias, gamma, beta, run_mean, run_var,
                      padding, eps=1e-5):
    y = jax.lax.conv_general_dilated(
        x, weight, window_strides=(1, 1),
        padding=((padding, padding), (padding, padding)),
        dimension_numbers=("NCHW", "OIHW", "NCHW"))
    y = y + conv_bias[None, :, None, None]
    scale = gamma / jnp.sqrt(run_var + eps)
    shift = beta - run_mean * scale
    y = y * scale[None, :, None, None] + shift[None, :, None, None]
    return jnp.maximum(y, 0.0)


if __name__ == "__main__":
    # Conv2d(in_channels=4, out_channels=8, kernel_size=3, padding=1),
    # BatchNorm2d(8) in eval mode, ReLU.  Input x: (2, 4, 16, 16) NCHW.
    key = jax.random.PRNGKey(0)
    k_x, k_w, k_b, k_g, k_be, k_m, k_v = jax.random.split(key, 7)

    N, C_in, H, W = 2, 4, 16, 16
    C_out, KH, KW, PAD = 8, 3, 3, 1

    x = jax.random.normal(k_x, (N, C_in, H, W), dtype=jnp.float32)
    weight = jax.random.normal(k_w, (C_out, C_in, KH, KW), dtype=jnp.float32) * 0.1
    conv_bias = jax.random.normal(k_b, (C_out,), dtype=jnp.float32) * 0.1
    gamma = 1.0 + 0.1 * jax.random.normal(k_g, (C_out,), dtype=jnp.float32)
    beta = 0.1 * jax.random.normal(k_be, (C_out,), dtype=jnp.float32)
    run_mean = 0.1 * jax.random.normal(k_m, (C_out,), dtype=jnp.float32)
    run_var = jnp.abs(1.0 + 0.1 * jax.random.normal(k_v, (C_out,), dtype=jnp.float32))

    out = custom_conv2d_forward(
        x, weight, conv_bias, gamma, beta, run_mean, run_var,
        kh=KH, kw=KW, padding=PAD)
    out = jax.block_until_ready(out)

    ref = reference_forward(x, weight, conv_bias, gamma, beta, run_mean, run_var, PAD)
    ref = jax.block_until_ready(ref)

    assert out.shape == (N, C_out, H, W), out.shape
    assert jnp.allclose(out, ref, atol=1e-4, rtol=1e-4), "mismatch vs reference"
    print("KERNEL_OK")
</pallas_src>

<mosaic_0001>
module attributes {stable_mosaic.version = 11 : i64} {
  func.func @_conv_bn_relu_kernel(%arg0: i32, %arg1: memref<1x4x324xf32, #tpu.memory_space<vmem>>, %arg2: memref<9x8x4xf32, #tpu.memory_space<vmem>>, %arg3: memref<8x1xf32, #tpu.memory_space<vmem>>, %arg4: memref<8x1xf32, #tpu.memory_space<vmem>>, %arg5: memref<1x8x286xf32, #tpu.memory_space<vmem>>) attributes {dimension_semantics = [#tpu.dimension_semantics<parallel>], iteration_bounds = array<i64: 2>, scalar_prefetch = 0 : i64, scratch_operands = 0 : i64, tpu.core_type = #tpu.core_type<tc>, window_params = [{transform_indices = @transform_0, window_bounds = array<i64: 1, 4, 324>}, {pipeline_mode = #tpu.pipeline_mode<synchronous>, transform_indices = @transform_1, window_bounds = array<i64: 9, 8, 4>}, {pipeline_mode = #tpu.pipeline_mode<synchronous>, transform_indices = @transform_2, window_bounds = array<i64: 8, 1>}, {pipeline_mode = #tpu.pipeline_mode<synchronous>, transform_indices = @transform_3, window_bounds = array<i64: 8, 1>}, {transform_indices = @transform_4, window_bounds = array<i64: 1, 8, 286>}]} {
    %c0 = arith.constant 0 : index
    %c0_0 = arith.constant 0 : index
    %c0_1 = arith.constant 0 : index
    %0 = vector.load %arg1[%c0, %c0_0, %c0_1] : memref<1x4x324xf32, #tpu.memory_space<vmem>>, vector<1x4x324xf32>
    %1 = vector.shape_cast %0 : vector<1x4x324xf32> to vector<4x324xf32>
    %cst = arith.constant 0.000000e+00 : f32
    %2 = vector.broadcast %cst : f32 to vector<8x286xf32>
    %3 = vector.extract_strided_slice %1 {offsets = [0, 0], sizes = [4, 286], strides = [1, 1]} : vector<4x324xf32> to vector<4x286xf32>
    %c0_2 = arith.constant 0 : index
    %c0_3 = arith.constant 0 : index
    %c0_4 = arith.constant 0 : index
    %4 = vector.load %arg2[%c0_2, %c0_3, %c0_4] : memref<9x8x4xf32, #tpu.memory_space<vmem>>, vector<1x8x4xf32>
    %5 = vector.shape_cast %4 : vector<1x8x4xf32> to vector<8x4xf32>
    %cst_5 = arith.constant dense<0.000000e+00> : vector<8x286xf32>
    %6 = tpu.matmul %5, %3, %cst_5 {dimension_numbers = #tpu.dot_dimension_numbers<[1], [0], [0], [1], [0, 0, 1, 1], [], []>} : vector<8x4xf32>, vector<4x286xf32>, vector<8x286xf32> -> vector<8x286xf32>
    %7 = arith.addf %2, %6 : vector<8x286xf32>
    %8 = vector.extract_strided_slice %1 {offsets = [0, 1], sizes = [4, 286], strides = [1, 1]} : vector<4x324xf32> to vector<4x286xf32>
    %c1 = arith.constant 1 : index
    %c0_6 = arith.constant 0 : index
    %c0_7 = arith.constant 0 : index
    %9 = vector.load %arg2[%c1, %c0_6, %c0_7] : memref<9x8x4xf32, #tpu.memory_space<vmem>>, vector<1x8x4xf32>
    %10 = vector.shape_cast %9 : vector<1x8x4xf32> to vector<8x4xf32>
    %cst_8 = arith.constant dense<0.000000e+00> : vector<8x286xf32>
    %11 = tpu.matmul %10, %8, %cst_8 {dimension_numbers = #tpu.dot_dimension_numbers<[1], [0], [0], [1], [0, 0, 1, 1], [], []>} : vector<8x4xf32>, vector<4x286xf32>, vector<8x286xf32> -> vector<8x286xf32>
    %12 = arith.addf %7, %11 : vector<8x286xf32>
    %13 = vector.extract_strided_slice %1 {offsets = [0, 2], sizes = [4, 286], strides = [1, 1]} : vector<4x324xf32> to vector<4x286xf32>
    %c2 = arith.constant 2 : index
    %c0_9 = arith.constant 0 : index
    %c0_10 = arith.constant 0 : index
    %14 = vector.load %arg2[%c2, %c0_9, %c0_10] : memref<9x8x4xf32, #tpu.memory_space<vmem>>, vector<1x8x4xf32>
    %15 = vector.shape_cast %14 : vector<1x8x4xf32> to vector<8x4xf32>
    %cst_11 = arith.constant dense<0.000000e+00> : vector<8x286xf32>
    %16 = tpu.matmul %15, %13, %cst_11 {dimension_numbers = #tpu.dot_dimension_numbers<[1], [0], [0], [1], [0, 0, 1, 1], [], []>} : vector<8x4xf32>, vector<4x286xf32>, vector<8x286xf32> -> vector<8x286xf32>
    %17 = arith.addf %12, %16 : vector<8x286xf32>
    %18 = vector.extract_strided_slice %1 {offsets = [0, 18], sizes = [4, 286], strides = [1, 1]} : vector<4x324xf32> to vector<4x286xf32>
    %c3 = arith.constant 3 : index
    %c0_12 = arith.constant 0 : index
    %c0_13 = arith.constant 0 : index
    %19 = vector.load %arg2[%c3, %c0_12, %c0_13] : memref<9x8x4xf32, #tpu.memory_space<vmem>>, vector<1x8x4xf32>
    %20 = vector.shape_cast %19 : vector<1x8x4xf32> to vector<8x4xf32>
    %cst_14 = arith.constant dense<0.000000e+00> : vector<8x286xf32>
    %21 = tpu.matmul %20, %18, %cst_14 {dimension_numbers = #tpu.dot_dimension_numbers<[1], [0], [0], [1], [0, 0, 1, 1], [], []>} : vector<8x4xf32>, vector<4x286xf32>, vector<8x286xf32> -> vector<8x286xf32>
    %22 = arith.addf %17, %21 : vector<8x286xf32>
    %23 = vector.extract_strided_slice %1 {offsets = [0, 19], sizes = [4, 286], strides = [1, 1]} : vector<4x324xf32> to vector<4x286xf32>
    %c4 = arith.constant 4 : index
    %c0_15 = arith.constant 0 : index
    %c0_16 = arith.constant 0 : index
    %24 = vector.load %arg2[%c4, %c0_15, %c0_16] : memref<9x8x4xf32, #tpu.memory_space<vmem>>, vector<1x8x4xf32>
    %25 = vector.shape_cast %24 : vector<1x8x4xf32> to vector<8x4xf32>
    %cst_17 = arith.constant dense<0.000000e+00> : vector<8x286xf32>
    %26 = tpu.matmul %25, %23, %cst_17 {dimension_numbers = #tpu.dot_dimension_numbers<[1], [0], [0], [1], [0, 0, 1, 1], [], []>} : vector<8x4xf32>, vector<4x286xf32>, vector<8x286xf32> -> vector<8x286xf32>
    %27 = arith.addf %22, %26 : vector<8x286xf32>
    %28 = vector.extract_strided_slice %1 {offsets = [0, 20], sizes = [4, 286], strides = [1, 1]} : vector<4x324xf32> to vector<4x286xf32>
    %c5 = arith.constant 5 : index
    %c0_18 = arith.constant 0 : index
    %c0_19 = arith.constant 0 : index
    %29 = vector.load %arg2[%c5, %c0_18, %c0_19] : memref<9x8x4xf32, #tpu.memory_space<vmem>>, vector<1x8x4xf32>
    %30 = vector.shape_cast %29 : vector<1x8x4xf32> to vector<8x4xf32>
    %cst_20 = arith.constant dense<0.000000e+00> : vector<8x286xf32>
    %31 = tpu.matmul %30, %28, %cst_20 {dimension_numbers = #tpu.dot_dimension_numbers<[1], [0], [0], [1], [0, 0, 1, 1], [], []>} : vector<8x4xf32>, vector<4x286xf32>, vector<8x286xf32> -> vector<8x286xf32>
    %32 = arith.addf %27, %31 : vector<8x286xf32>
    %33 = vector.extract_strided_slice %1 {offsets = [0, 36], sizes = [4, 286], strides = [1, 1]} : vector<4x324xf32> to vector<4x286xf32>
    %c6 = arith.constant 6 : index
    %c0_21 = arith.constant 0 : index
    %c0_22 = arith.constant 0 : index
    %34 = vector.load %arg2[%c6, %c0_21, %c0_22] : memref<9x8x4xf32, #tpu.memory_space<vmem>>, vector<1x8x4xf32>
    %35 = vector.shape_cast %34 : vector<1x8x4xf32> to vector<8x4xf32>
    %cst_23 = arith.constant dense<0.000000e+00> : vector<8x286xf32>
    %36 = tpu.matmul %35, %33, %cst_23 {dimension_numbers = #tpu.dot_dimension_numbers<[1], [0], [0], [1], [0, 0, 1, 1], [], []>} : vector<8x4xf32>, vector<4x286xf32>, vector<8x286xf32> -> vector<8x286xf32>
    %37 = arith.addf %32, %36 : vector<8x286xf32>
    %38 = vector.extract_strided_slice %1 {offsets = [0, 37], sizes = [4, 286], strides = [1, 1]} : vector<4x324xf32> to vector<4x286xf32>
    %c7 = arith.constant 7 : index
    %c0_24 = arith.constant 0 : index
    %c0_25 = arith.constant 0 : index
    %39 = vector.load %arg2[%c7, %c0_24, %c0_25] : memref<9x8x4xf32, #tpu.memory_space<vmem>>, vector<1x8x4xf32>
    %40 = vector.shape_cast %39 : vector<1x8x4xf32> to vector<8x4xf32>
    %cst_26 = arith.constant dense<0.000000e+00> : vector<8x286xf32>
    %41 = tpu.matmul %40, %38, %cst_26 {dimension_numbers = #tpu.dot_dimension_numbers<[1], [0], [0], [1], [0, 0, 1, 1], [], []>} : vector<8x4xf32>, vector<4x286xf32>, vector<8x286xf32> -> vector<8x286xf32>
    %42 = arith.addf %37, %41 : vector<8x286xf32>
    %43 = vector.extract_strided_slice %1 {offsets = [0, 38], sizes = [4, 286], strides = [1, 1]} : vector<4x324xf32> to vector<4x286xf32>
    %c8 = arith.constant 8 : index
    %c0_27 = arith.constant 0 : index
    %c0_28 = arith.constant 0 : index
    %44 = vector.load %arg2[%c8, %c0_27, %c0_28] : memref<9x8x4xf32, #tpu.memory_space<vmem>>, vector<1x8x4xf32>
    %45 = vector.shape_cast %44 : vector<1x8x4xf32> to vector<8x4xf32>
    %cst_29 = arith.constant dense<0.000000e+00> : vector<8x286xf32>
    %46 = tpu.matmul %45, %43, %cst_29 {dimension_numbers = #tpu.dot_dimension_numbers<[1], [0], [0], [1], [0, 0, 1, 1], [], []>} : vector<8x4xf32>, vector<4x286xf32>, vector<8x286xf32> -> vector<8x286xf32>
    %47 = arith.addf %42, %46 : vector<8x286xf32>
    %c0_30 = arith.constant 0 : index
    %c0_31 = arith.constant 0 : index
    %48 = vector.load %arg3[%c0_30, %c0_31] : memref<8x1xf32, #tpu.memory_space<vmem>>, vector<8x1xf32>
    %49 = vector.broadcast %48 : vector<8x1xf32> to vector<8x286xf32>
    %50 = arith.mulf %47, %49 : vector<8x286xf32>
    %c0_32 = arith.constant 0 : index
    %c0_33 = arith.constant 0 : index
    %51 = vector.load %arg4[%c0_32, %c0_33] : memref<8x1xf32, #tpu.memory_space<vmem>>, vector<8x1xf32>
    %52 = vector.broadcast %51 : vector<8x1xf32> to vector<8x286xf32>
    %53 = arith.addf %50, %52 : vector<8x286xf32>
    %cst_34 = arith.constant 0.000000e+00 : f32
    %54 = vector.broadcast %cst_34 : f32 to vector<8x286xf32>
    %55 = arith.maximumf %53, %54 : vector<8x286xf32>
    %c0_35 = arith.constant 0 : index
    %c0_36 = arith.constant 0 : index
    %c0_37 = arith.constant 0 : index
    %56 = vector.load %arg5[%c0_35, %c0_36, %c0_37] : memref<1x8x286xf32, #tpu.memory_space<vmem>>, vector<1x8x286xf32>
    %57 = vector.shape_cast %56 : vector<1x8x286xf32> to vector<8x286xf32>
    %58 = vector.shape_cast %55 : vector<8x286xf32> to vector<1x8x286xf32>
    tpu.vector_store %arg5[%c0_35, %c0_36, %c0_37], %58 {strides = array<i32>} : memref<1x8x286xf32, #tpu.memory_space<vmem>>, vector<1x8x286xf32>,
    return
  }
  func.func @transform_0(%arg0: i32) -> (i32, i32, i32) {
    %c0_i32 = arith.constant 0 : i32
    %c0_i32_0 = arith.constant 0 : i32
    %c0_i32_1 = arith.constant 0 : i32
    return %arg0, %c0_i32, %c0_i32_0 : i32, i32, i32
  }
  func.func @transform_1(%arg0: i32) -> (i32, i32, i32) {
    %c0_i32 = arith.constant 0 : i32
    %c0_i32_0 = arith.constant 0 : i32
    %c0_i32_1 = arith.constant 0 : i32
    %c0_i32_2 = arith.constant 0 : i32
    return %c0_i32, %c0_i32_0, %c0_i32_1 : i32, i32, i32
  }
  func.func @transform_2(%arg0: i32) -> (i32, i32) {
    %c0_i32 = arith.constant 0 : i32
    %c0_i32_0 = arith.constant 0 : i32
    %c0_i32_1 = arith.constant 0 : i32
    return %c0_i32, %c0_i32_0 : i32, i32
  }
  func.func @transform_3(%arg0: i32) -> (i32, i32) {
    %c0_i32 = arith.constant 0 : i32
    %c0_i32_0 = arith.constant 0 : i32
    %c0_i32_1 = arith.constant 0 : i32
    return %c0_i32, %c0_i32_0 : i32, i32
  }
  func.func @transform_4(%arg0: i32) -> (i32, i32, i32) {
    %c0_i32 = arith.constant 0 : i32
    %c0_i32_0 = arith.constant 0 : i32
    %c0_i32_1 = arith.constant 0 : i32
    return %arg0, %c0_i32, %c0_i32_0 : i32, i32, i32
  }
}

</mosaic_0001>

<llo_original>
// kernel: custom_conv2d_forward.1
$region0: #{custom_conv2d_forward.1}
  #allocation0 [shape = 'u32[]', space=smem, size = 0x4, offset = 0x4, fixed_abs, tag = 'smem constant byte address 0x4 - core index']
  #allocation1 [shape = 'u32[144,128]{1,0:T(1,128)}', space=vmem, size = 0x12000, scoped, tag = 'internal scratch']
  %s0 = inlined_call_operand.vmem [shape: f32[2,4,324], index: 0, kind: input, shape index: {}]
  %s1 = inlined_call_operand.vmem [shape: f32[9,8,4], index: 1, kind: input, shape index: {}]
  %s2 = inlined_call_operand.vmem [shape: f32[8,1], index: 2, kind: input, shape index: {}]
  %s3 = inlined_call_operand.vmem [shape: f32[8,1], index: 3, kind: input, shape index: {}]
  %s4 = inlined_call_operand.vmem [shape: f32[2,8,286], index: 4, kind: output, shape index: {}]
  %s5 = sld [smem:[#allocation0]]
  $region49: #{custom_conv2d_forward.1} parent=0
    _
  %s7 = ssub.s32 1, %s5
  %s8 = scalar_select 0, %s7, %s5
  loop: start=0, step=1, limit=4
  $region2: #{custom_conv2d_forward.1} parent=0 // loop_pre_header
    _
  $region3: #{custom_conv2d_forward.1} parent=0 // loop_header
    %s10 = sphi 0, %s14
    %p11 = scmp.ge.s32.totalorder %s10, 4
    %s20 = sphi 0, %s22
    %s23 = sphi 0, %s20
    %s24 = sphi 0, %s23
    %s40 = sphi 0, %s24
    %s44 = sphi 0, %s44
    %s46 = sphi 0, %s44
    %s47 = sphi 0, %s46
    %s61 = sphi 0, %s47
    %s65 = sphi 0, %s65
    %s67 = sphi 0, %s65
    %s68 = sphi 0, %s67
    %s82 = sphi 0, %s68
    %s86 = sphi 0, %s86
    %s88 = sphi 0, %s86
    %s89 = sphi 0, %s88
    %s103 = sphi 0, %s89
    %s109 = sphi 0, %s111
    %s112 = sphi 0, %s109
    %s113 = sphi 0, %s112
    %s129 = sphi 0, %s113
  $region4: #{custom_conv2d_forward.1} parent=0 // loop_header_branch
    %13 = sbr.rel (%p11) target = $region8
  $region5: #{custom_conv2d_forward.1} parent=0 // loop_body
    %s15 = ssub.s32 %s10, 1
    %s16 = ssub.s32 %s10, 2
    %s17 = sadd.s32 %s10, 1
    %s18 = ssub.s32 %s10, %s17
    %p19 = scmp.eq.s32.totalorder %s18, 0
    %s21 = sadd.s32 %s20, 1
    %s22 = scalar_select %p19, %s20, %s21
    %p25 = pneg %p19
    %p26 = scmp.eq.s32.totalorder %s10, 1
    %p27 = por %p25, %p26
    %p28 = scmp.ne.s32.totalorder %s20, %s23
    %p29 = scmp.eq.s32.totalorder %s10, 0
    %p30 = por %p28, %p29
    %p31 = scmp.ne.s32.totalorder %s20, %s23
    %p32 = scmp.eq.s32.totalorder %s15, 1
    %p33 = por %p31, %p32
    %p34 = scmp.ne.s32.totalorder %s23, %s24
    %p35 = scmp.eq.s32.totalorder %s15, 0
    %p36 = por %p34, %p35
    %p37 = scmp.ne.s32.totalorder %s23, %s24
    %p38 = scmp.eq.s32.totalorder %s16, 1
    %p39 = por %p37, %p38
    %p41 = scmp.ne.s32.totalorder %s24, %s40
    %p42 = scmp.eq.s32.totalorder %s16, 0
    %p43 = por %p41, %p42
    %s45 = sadd.s32 %s44, 1
    %p48 = scmp.eq.s32.totalorder %s10, 1
    %p49 = scmp.ne.s32.totalorder %s44, %s46
    %p50 = scmp.eq.s32.totalorder %s10, 0
    %p51 = por %p49, %p50
    %p52 = scmp.ne.s32.totalorder %s44, %s46
    %p53 = scmp.eq.s32.totalorder %s15, 1
    %p54 = por %p52, %p53
    %p55 = scmp.ne.s32.totalorder %s46, %s47
    %p56 = scmp.eq.s32.totalorder %s15, 0
    %p57 = por %p55, %p56
    %p58 = scmp.ne.s32.totalorder %s46, %s47
    %p59 = scmp.eq.s32.totalorder %s16, 1
    %p60 = por %p58, %p59
    %p62 = scmp.ne.s32.totalorder %s47, %s61
    %p63 = scmp.eq.s32.totalorder %s16, 0
    %p64 = por %p62, %p63
    %s66 = sadd.s32 %s65, 1
    %p69 = scmp.eq.s32.totalorder %s10, 1
    %p70 = scmp.ne.s32.totalorder %s65, %s67
    %p71 = scmp.eq.s32.totalorder %s10, 0
    %p72 = por %p70, %p71
    %p73 = scmp.ne.s32.totalorder %s65, %s67
    %p74 = scmp.eq.s32.totalorder %s15, 1
    %p75 = por %p73, %p74
    %p76 = scmp.ne.s32.totalorder %s67, %s68
    %p77 = scmp.eq.s32.totalorder %s15, 0
    %p78 = por %p76, %p77
    %p79 = scmp.ne.s32.totalorder %s67, %s68
    %p80 = scmp.eq.s32.totalorder %s16, 1
    %p81 = por %p79, %p80
    %p83 = scmp.ne.s32.totalorder %s68, %s82
    %p84 = scmp.eq.s32.totalorder %s16, 0
    %p85 = por %p83, %p84
    %s87 = sadd.s32 %s86, 1
    %p90 = scmp.eq.s32.totalorder %s10, 1
    %p91 = scmp.ne.s32.totalorder %s86, %s88
    %p92 = scmp.eq.s32.totalorder %s10, 0
    %p93 = por %p91, %p92
    %p94 = scmp.ne.s32.totalorder %s86, %s88
    %p95 = scmp.eq.s32.totalorder %s15, 1
    %p96 = por %p94, %p95
    %p97 = scmp.ne.s32.totalorder %s88, %s89
    %p98 = scmp.eq.s32.totalorder %s15, 0
    %p99 = por %p97, %p98
    %p100 = scmp.ne.s32.totalorder %s88, %s89
    %p101 = scmp.eq.s32.totalorder %s16, 1
    %p102 = por %p100, %p101
    %p104 = scmp.ne.s32.totalorder %s89, %s103
    %p105 = scmp.eq.s32.totalorder %s16, 0
    %p106 = por %p104, %p105
    %s107 = ssub.s32 %s10, %s17
    %p108 = scmp.eq.s32.totalorder %s107, 0
    %s110 = sadd.s32 %s109, 1
    %s111 = scalar_select %p108, %s109, %s110
    %p114 = pneg %p108
    %p115 = scmp.eq.s32.totalorder %s10, 1
    %p116 = por %p114, %p115
    %p117 = scmp.ne.s32.totalorder %s109, %s112
    %p118 = scmp.eq.s32.totalorder %s10, 0
    %p119 = por %p117, %p118
    %p120 = scmp.ne.s32.totalorder %s109, %s112
    %p121 = scmp.eq.s32.totalorder %s15, 1
    %p122 = por %p120, %p121
    %p123 = scmp.ne.s32.totalorder %s112, %s113
    %p124 = scmp.eq.s32.totalorder %s15, 0
    %p125 = por %p123, %p124
    %p126 = scmp.ne.s32.totalorder %s112, %s113
    %p127 = scmp.eq.s32.totalorder %s16, 1
    %p128 = por %p126, %p127
    %p130 = scmp.ne.s32.totalorder %s113, %s129
    %p131 = scmp.eq.s32.totalorder %s16, 0
    %p132 = por %p130, %p131
    %p133 = scmp.le.s32.totalorder 1, %s10
    %p134 = scmp.lt.s32.totalorder %s10, 3
    %p135 = pnand %p133, %p134
    %p136 = pneg %p135
    // Predicated region
    $region9: #{custom_conv2d_forward.1} parent=5 // pred_check
      _
    $region10: #{custom_conv2d_forward.1} parent=5 // pred_check_branch
      %138 = sbr.rel (%p135) target = $region12
    $region11: #{custom_conv2d_forward.1} parent=5 // pred_region
      %s139 = ssub.s32 %s10, 1
      // Predicated region
      $region13: #{custom_conv2d_forward.1} parent=11 // pred_check
        %p140 = pneg %p57
      $region14: #{custom_conv2d_forward.1} parent=11 // pred_check_branch
        %142 = sbr.rel (%p140) target = $region16
      $region15: #{custom_conv2d_forward.1} parent=11 // pred_region
        _
      $region16: #{custom_conv2d_forward.1} parent=11 // pred_fallthru
        _
      // Predicated region
      $region17: #{custom_conv2d_forward.1} parent=11 // pred_check
        %p143 = pneg %p78
      $region18: #{custom_conv2d_forward.1} parent=11 // pred_check_branch
        %145 = sbr.rel (%p143) target = $region20
      $region19: #{custom_conv2d_forward.1} parent=11 // pred_region
        _
      $region20: #{custom_conv2d_forward.1} parent=11 // pred_fallthru
        _
      // Predicated region
      $region21: #{custom_conv2d_forward.1} parent=11 // pred_check
        %p146 = pneg %p99
      $region22: #{custom_conv2d_forward.1} parent=11 // pred_check_branch
        %148 = sbr.rel (%p146) target = $region24
      $region23: #{custom_conv2d_forward.1} parent=11 // pred_region
        _
      $region24: #{custom_conv2d_forward.1} parent=11 // pred_fallthru
        _
    $region12: #{custom_conv2d_forward.1} parent=5 // pred_fallthru
      _
    %p149 = scmp.lt.s32.totalorder %s10, 2
    // Predicated region
    $region25: #{custom_conv2d_forward.1} parent=5 // pred_check
      %p150 = pneg %p149
    $region26: #{custom_conv2d_forward.1} parent=5 // pred_check_branch
      %152 = sbr.rel (%p150) target = $region28
    $region27: #{custom_conv2d_forward.1} parent=5 // pred_region
      // Predicated region
      $region29: #{custom_conv2d_forward.1} parent=27 // pred_check
        %p153 = pneg %p30
      $region30: #{custom_conv2d_forward.1} parent=27 // pred_check_branch
        %155 = sbr.rel (%p153) target = $region32
      $region31: #{custom_conv2d_forward.1} parent=27 // pred_region
        %p156 = scmp.lt.s32.totalorder %s10, 1
        %s157 = scalar_select %p156, %s10, 1
        %s158 = smul.addr %s157, 3
        %s159 = smul.addr %s158, 4
        %s160 = scalar_lea.vmem %s0, %s159
      $region32: #{custom_conv2d_forward.1} parent=27 // pred_fallthru
        _
    $region28: #{custom_conv2d_forward.1} parent=5 // pred_fallthru
      _
    %p161 = scmp.le.s32.totalorder 1, %s10
    %p162 = scmp.lt.s32.totalorder %s10, 3
    %p163 = pnand %p161, %p162
    %p164 = pneg %p163
    // Predicated region
    $region33: #{custom_conv2d_forward.1} parent=5 // pred_check
      _
    $region34: #{custom_conv2d_forward.1} parent=5 // pred_check_branch
      %166 = sbr.rel (%p163) target = $region36
    $region35: #{custom_conv2d_forward.1} parent=5 // pred_region
      %s167 = ssub.s32 %s10, 1
      %p168 = scmp.lt.s32.totalorder %s15, 1
      %s169 = scalar_select %p168, %s15, 1
      %s170 = smul.addr %s169, 3
      %s171 = smul.addr %s170, 4
      %s172 = scalar_lea.vmem %s0, %s171
      %p173 = pneg %p36
      %p174 = pneg %p33
      %p175 = pneg %p57
      %p176 = pneg %p54
      %p177 = pneg %p78
      %p178 = pneg %p75
      %p179 = pneg %p99
      %p180 = pneg %p96
      %p181 = pneg %p125
      %p182 = pneg %p122
      %p183 = scmp.lt.s32.totalorder %s15, 1
      %s184 = scalar_select %p183, %s15, 1
      %s185 = smul.addr %s184, 3
      %s186 = smul.addr %s185, 8
      %s187 = scalar_lea.vmem %s4, %s186
      %p188 = scmp.lt.s32.totalorder %s15, 1
      %s189 = scalar_select %p188, %s15, 1
      %s190 = smul.addr %s189, 3
      %s191 = smul.addr %s190, 4
      %s192 = scalar_lea.vmem %s0, %s191
      %p193 = scmp.lt.s32.totalorder %s15, 1
      %s194 = scalar_select %p193, %s15, 1
      %s195 = smul.addr %s194, 3
      %s196 = smul.addr %s195, 8
      %s197 = scalar_lea.vmem %s4, %s196
      %v198 = vld [vmem:[%s192] sm:$0xff]
      %v199 = vld [vmem:[%s192 + $0x8] sm:$0xf]
      %v200 = vld [vmem:[%s1] sm:$0xff]
      %s201 = scalar_lea.vmem %s1, 8
      %v202 = vld [vmem:[%s201] sm:$0xff]
      %v205 = vcombine.high %v198, %v198
      %206 = vrot.lane.b32.xlu0 %v198, 127
      %v207 = vpop.permute.xlu0 %206
      %208 = vrot.lane.b32.xlu0 %v205, 127
      %v209 = vpop.permute.xlu0 %208
      %210 = vrot.lane.b32.xlu0 %v199, 127
      %v211 = vpop.permute.xlu0 %210
      %vm212 = vcmask 1039360
      %v213 = vsel %vm212, %v207, %v209
      %v214 = vsel %vm212, %v209, %v211
      %vm215 = vcmask 31744
      %v217 = vsel %vm215, %v202, 0
      %vm219 = vcmask 1043456
      %v220 = vsel %vm219, %v213, 0
      %v222 = vsel %vm219, %v214, 0
      %v224 = vsel %vm219, %v211, 0
      %226 = vmatprep.subr.mxu0 %v222
      %227 = vmatpush1.msra.mxu0 %v220
      %228 = vmatprep.subr.mxu0 0.0
      %229 = vmatpush1.msra.mxu0 0.0
      %230 = vmatprep.subr.mxu0 0.0
      %231 = vmatpush1.msra.mxu0 0.0
      %232 = vmatprep.subr.mxu0 0.0
      %233 = vmatpush1.msra.mxu0 0.0
      %234 = vmatprep.subr.mxu0 0.0
      %235 = vmatpush1.msra.mxu0 0.0
      %236 = vmatprep.subr.mxu0 0.0
      %237 = vmatpush1.msra.mxu0 0.0
      %238 = vmatprep.subr.mxu0 0.0
      %239 = vmatpush1.msra.mxu0 0.0
      %240 = vmatprep.subr.mxu0 0.0
      %241 = vmatpush1.msra.mxu0 0.0
      %242 = vmatprep.subr.mxu0 0.0
      %243 = vmatpush1.msra.mxu0 0.0
      %244 = vmatprep.subr.mxu0 0.0
      %245 = vmatpush1.msra.mxu0 0.0
      %246 = vmatprep.subr.mxu0 0.0
      %247 = vmatpush1.msra.mxu0 0.0
      %248 = vmatprep.subr.mxu0 0.0
      %249 = vmatpush1.msra.mxu0 0.0
      %250 = vmatprep.subr.mxu0 0.0
      %251 = vmatpush1.msra.mxu0 0.0
      %252 = vmatprep.subr.mxu0 0.0
      %253 = vmatpush1.msra.mxu0 0.0
      %254 = vmatprep.subr.mxu0 0.0
      %255 = vmatpush1.msra.mxu0 0.0
      %256 = vmatprep.subr.mxu0 0.0
      %257 = vmatpush1.msra.mxu0 0.0
      %258 = vmatprep.subr.mxu0 0.0
      %259 = vmatpush1.msra.mxu0 0.0
      %260 = vmatprep.subr.mxu0 0.0
      %261 = vmatpush1.msra.mxu0 0.0
      %262 = vmatprep.subr.mxu0 0.0
      %263 = vmatpush1.msra.mxu0 0.0
      %264 = vmatprep.subr.mxu0 0.0
      %265 = vmatpush1.msra.mxu0 0.0
      %266 = vmatprep.subr.mxu0 0.0
      %267 = vmatpush1.msra.mxu0 0.0
      %268 = vmatprep.subr.mxu0 0.0
      %269 = vmatpush1.msra.mxu0 0.0
      %270 = vmatprep.subr.mxu0 0.0
      %271 = vmatpush1.msra.mxu0 0.0
      %272 = vmatprep.subr.mxu0 0.0
      %273 = vmatpush1.msra.mxu0 0.0
      %274 = vmatprep.subr.mxu0 0.0
      %275 = vmatpush1.msra.mxu0 0.0
      %276 = vmatprep.subr.mxu0 0.0
      %277 = vmatpush1.msra.mxu0 0.0
      %278 = vmatprep.subr.mxu0 0.0
      %279 = vmatpush1.msra.mxu0 0.0
      %280 = vmatprep.subr.mxu0 0.0
      %281 = vmatpush1.msra.mxu0 0.0
      %282 = vmatprep.subr.mxu0 0.0
      %283 = vmatpush1.msra.mxu0 0.0
      %284 = vmatprep.subr.mxu0 0.0
      %285 = vmatpush1.msra.mxu0 0.0
      %286 = vmatprep.subr.mxu0 0.0
      %287 = vmatpush1.msra.mxu0 0.0
      %288 = vmatprep.subr.mxu0 0.0
      %289 = vmatpush1.msra.mxu0 0.0
      %290 = vmatprep.mubr.f32.mxu0 0.0
      %291 = vmatmul.mubr.f32.gmra.mrb[0].mxu0 %v217
      %v292 = vpop.f32.mrb[0].mxu0
      %v293 = vadd.f32 0.0, %v292
      %v294 = vpop.f32.mrb[0].mxu0
      %v295 = vadd.f32 0.0, %v294
      %296 = vdwg.mxu0
      %297 = vmatprep.subr.mxu0 0.0
      %298 = vmatpush1.msra.mxu0 %v224
      %299 = vmatprep.subr.mxu0 0.0
      %300 = vmatpush1.msra.mxu0 0.0
      %301 = vmatprep.subr.mxu0 0.0
      %302 = vmatpush1.msra.mxu0 0.0
      %303 = vmatprep.subr.mxu0 0.0
      %304 = vmatpush1.msra.mxu0 0.0
      %305 = vmatprep.subr.mxu0 0.0
      %306 = vmatpush1.msra.mxu0 0.0
      %307 = vmatprep.subr.mxu0 0.0
      %308 = vmatpush1.msra.mxu0 0.0
      %309 = vmatprep.subr.mxu0 0.0
      %310 = vmatpush1.msra.mxu0 0.0
      %311 = vmatprep.subr.mxu0 0.0
      %312 = vmatpush1.msra.mxu0 0.0
      %313 = vmatprep.subr.mxu0 0.0
      %314 = vmatpush1.msra.mxu0 0.0
      %315 = vmatprep.subr.mxu0 0.0
      %316 = vmatpush1.msra.mxu0 0.0
      %317 = vmatprep.subr.mxu0 0.0
      %318 = vmatpush1.msra.mxu0 0.0
      %319 = vmatprep.subr.mxu0 0.0
      %320 = vmatpush1.msra.mxu0 0.0
      %321 = vmatprep.subr.mxu0 0.0
      %322 = vmatpush1.msra.mxu0 0.0
      %323 = vmatprep.subr.mxu0 0.0
      %324 = vmatpush1.msra.mxu0 0.0
      %325 = vmatprep.subr.mxu0 0.0
      %326 = vmatpush1.msra.mxu0 0.0
      %327 = vmatprep.subr.mxu0 0.0
      %328 = vmatpush1.msra.mxu0 0.0
      %329 = vmatprep.subr.mxu0 0.0
      %330 = vmatpush1.msra.mxu0 0.0
      %331 = vmatprep.subr.mxu0 0.0
      %332 = vmatpush1.msra.mxu0 0.0
      %333 = vmatprep.subr.mxu0 0.0
      %334 = vmatpush1.msra.mxu0 0.0
      %335 = vmatprep.subr.mxu0 0.0
      %336 = vmatpush1.msra.mxu0 0.0
      %337 = vmatprep.subr.mxu0 0.0
      %338 = vmatpush1.msra.mxu0 0.0
      %339 = vmatprep.subr.mxu0 0.0
      %340 = vmatpush1.msra.mxu0 0.0
      %341 = vmatprep.subr.mxu0 0.0
      %342 = vmatpush1.msra.mxu0 0.0
      %343 = vmatprep.subr.mxu0 0.0
      %344 = vmatpush1.msra.mxu0 0.0
      %345 = vmatprep.subr.mxu0 0.0
      %346 = vmatpush1.msra.mxu0 0.0
      %347 = vmatprep.subr.mxu0 0.0
      %348 = vmatpush1.msra.mxu0 0.0
      %349 = vmatprep.subr.mxu0 0.0
      %350 = vmatpush1.msra.mxu0 0.0
      %351 = vmatprep.subr.mxu0 0.0
      %352 = vmatpush1.msra.mxu0 0.0
      %353 = vmatprep.subr.mxu0 0.0
      %354 = vmatpush1.msra.mxu0 0.0
      %355 = vmatprep.subr.mxu0 0.0
      %356 = vmatpush1.msra.mxu0 0.0
      %357 = vmatprep.subr.mxu0 0.0
      %358 = vmatpush1.msra.mxu0 0.0
      %359 = vmatprep.subr.mxu0 0.0
      %360 = vmatpush1.msra.mxu0 0.0
      %361 = vmatprep.mubr.f32.mxu0 0.0
      %362 = vmatmul.mubr.f32.gmra.mrb[0].mxu0 %v217
      %v363 = vpop.f32.mrb[0].mxu0
      %v364 = vadd.f32 0.0, %v363
      %v365 = vpop.f32.mrb[0].mxu0
      %366 = vdwg.mxu0
      %v368 = vsel %vm215, %v200, 0
      %v370 = vsel %vm219, %v198, 0
      %v372 = vsel %vm219, %v205, 0
      %v374 = vsel %vm219, %v199, 0
      %376 = vmatprep.subr.mxu0 %v372
      %377 = vmatpush1.msra.mxu0 %v370
      %378 = vmatprep.subr.mxu0 0.0
      %379 = vmatpush1.msra.mxu0 0.0
      %380 = vmatprep.subr.mxu0 0.0
      %381 = vmatpush1.msra.mxu0 0.0
      %382 = vmatprep.subr.mxu0 0.0
      %383 = vmatpush1.msra.mxu0 0.0
      %384 = vmatprep.subr.mxu0 0.0
      %385 = vmatpush1.msra.mxu0 0.0
      %386 = vmatprep.subr.mxu0 0.0
      %387 = vmatpush1.msra.mxu0 0.0
      %388 = vmatprep.subr.mxu0 0.0
      %389 = vmatpush1.msra.mxu0 0.0
      %390 = vmatprep.subr.mxu0 0.0
      %391 = vmatpush1.msra.mxu0 0.0
      %392 = vmatprep.subr.mxu0 0.0
      %393 = vmatpush1.msra.mxu0 0.0
      %394 = vmatprep.subr.mxu0 0.0
      %395 = vmatpush1.msra.mxu0 0.0
      %396 = vmatprep.subr.mxu0 0.0
      %397 = vmatpush1.msra.mxu0 0.0
      %398 = vmatprep.subr.mxu0 0.0
      %399 = vmatpush1.msra.mxu0 0.0
      %400 = vmatprep.subr.mxu0 0.0
      %401 = vmatpush1.msra.mxu0 0.0
      %402 = vmatprep.subr.mxu0 0.0
      %403 = vmatpush1.msra.mxu0 0.0
      %404 = vmatprep.subr.mxu0 0.0
      %405 = vmatpush1.msra.mxu0 0.0
      %406 = vmatprep.subr.mxu0 0.0
      %407 = vmatpush1.msra.mxu0 0.0
      %408 = vmatprep.subr.mxu0 0.0
      %409 = vmatpush1.msra.mxu0 0.0
      %410 = vmatprep.subr.mxu0 0.0
      %411 = vmatpush1.msra.mxu0 0.0
      %412 = vmatprep.subr.mxu0 0.0
      %413 = vmatpush1.msra.mxu0 0.0
      %414 = vmatprep.subr.mxu0 0.0
      %415 = vmatpush1.msra.mxu0 0.0
      %416 = vmatprep.subr.mxu0 0.0
      %417 = vmatpush1.msra.mxu0 0.0
      %418 = vmatprep.subr.mxu0 0.0
      %419 = vmatpush1.msra.mxu0 0.0
      %420 = vmatprep.subr.mxu0 0.0
      %421 = vmatpush1.msra.mxu0 0.0
      %422 = vmatprep.subr.mxu0 0.0
      %423 = vmatpush1.msra.mxu0 0.0
      %424 = vmatprep.subr.mxu0 0.0
      %425 = vmatpush1.msra.mxu0 0.0
      %426 = vmatprep.subr.mxu0 0.0
      %427 = vmatpush1.msra.mxu0 0.0
      %428 = vmatprep.subr.mxu0 0.0
      %429 = vmatpush1.msra.mxu0 0.0
      %430 = vmatprep.subr.mxu0 0.0
      %431 = vmatpush1.msra.mxu0 0.0
      %432 = vmatprep.subr.mxu0 0.0
      %433 = vmatpush1.msra.mxu0 0.0
      %434 = vmatprep.subr.mxu0 0.0
      %435 = vmatpush1.msra.mxu0 0.0
      %436 = vmatprep.subr.mxu0 0.0
      %437 = vmatpush1.msra.mxu0 0.0
      %438 = vmatprep.subr.mxu0 0.0
      %439 = vmatpush1.msra.mxu0 0.0
      %440 = vmatprep.mubr.f32.mxu0 0.0
      %441 = vmatmul.mubr.f32.gmra.mrb[0].mxu0 %v368
      %v442 = vpop.f32.mrb[0].mxu0
      %v443 = vadd.f32 %v293, %v442
      %v444 = vpop.f32.mrb[0].mxu0
      %v445 = vadd.f32 %v295, %v444
      %446 = vdwg.mxu0
      %447 = vmatprep.subr.mxu0 0.0
      %448 = vmatpush1.msra.mxu0 %v374
      %449 = vmatprep.subr.mxu0 0.0
      %450 = vmatpush1.msra.mxu0 0.0
      %451 = vmatprep.subr.mxu0 0.0
      %452 = vmatpush1.msra.mxu0 0.0
      %453 = vmatprep.subr.mxu0 0.0
      %454 = vmatpush1.msra.mxu0 0.0
      %455 = vmatprep.subr.mxu0 0.0
      %456 = vmatpush1.msra.mxu0 0.0
      %457 = vmatprep.subr.mxu0 0.0
      %458 = vmatpush1.msra.mxu0 0.0
      %459 = vmatprep.subr.mxu0 0.0
      %460 = vmatpush1.msra.mxu0 0.0
      %461 = vmatprep.subr.mxu0 0.0
      %462 = vmatpush1.msra.mxu0 0.0
      %463 = vmatprep.subr.mxu0 0.0
      %464 = vmatpush1.msra.mxu0 0.0
      %465 = vmatprep.subr.mxu0 0.0
      %466 = vmatpush1.msra.mxu0 0.0
      %467 = vmatprep.subr.mxu0 0.0
      %468 = vmatpush1.msra.mxu0 0.0
      %469 = vmatprep.subr.mxu0 0.0
      %470 = vmatpush1.msra.mxu0 0.0
      %471 = vmatprep.subr.mxu0 0.0
      %472 = vmatpush1.msra.mxu0 0.0
      %473 = vmatprep.subr.mxu0 0.0
      %474 = vmatpush1.msra.mxu0 0.0
      %475 = vmatprep.subr.mxu0 0.0
      %476 = vmatpush1.msra.mxu0 0.0
      %477 = vmatprep.subr.mxu0 0.0
      %478 = vmatpush1.msra.mxu0 0.0
      %479 = vmatprep.subr.mxu0 0.0
      %480 = vmatpush1.msra.mxu0 0.0
      %481 = vmatprep.subr.mxu0 0.0
      %482 = vmatpush1.msra.mxu0 0.0
      %483 = vmatprep.subr.mxu0 0.0
      %484 = vmatpush1.msra.mxu0 0.0
      %485 = vmatprep.subr.mxu0 0.0
      %486 = vmatpush1.msra.mxu0 0.0
      %487 = vmatprep.subr.mxu0 0.0
      %488 = vmatpush1.msra.mxu0 0.0
      %489 = vmatprep.subr.mxu0 0.0
      %490 = vmatpush1.msra.mxu0 0.0
      %491 = vmatprep.subr.mxu0 0.0
      %492 = vmatpush1.msra.mxu0 0.0
      %493 = vmatprep.subr.mxu0 0.0
      %494 = vmatpush1.msra.mxu0 0.0
      %495 = vmatprep.subr.mxu0 0.0
      %496 = vmatpush1.msra.mxu0 0.0
      %497 = vmatprep.subr.mxu0 0.0
      %498 = vmatpush1.msra.mxu0 0.0
      %499 = vmatprep.subr.mxu0 0.0
      %500 = vmatpush1.msra.mxu0 0.0
      %501 = vmatprep.subr.mxu0 0.0
      %502 = vmatpush1.msra.mxu0 0.0
      %503 = vmatprep.subr.mxu0 0.0
      %504 = vmatpush1.msra.mxu0 0.0
      %505 = vmatprep.subr.mxu0 0.0
      %506 = vmatpush1.msra.mxu0 0.0
      %507 = vmatprep.subr.mxu0 0.0
      %508 = vmatpush1.msra.mxu0 0.0
      %509 = vmatprep.subr.mxu0 0.0
      %510 = vmatpush1.msra.mxu0 0.0
      %511 = vmatprep.mubr.f32.mxu0 0.0
      %512 = vmatmul.mubr.f32.gmra.mrb[0].mxu0 %v368
      %v513 = vpop.f32.mrb[0].mxu0
      %v514 = vadd.f32 %v364, %v513
      %v515 = vpop.f32.mrb[0].mxu0
      %516 = vdwg.mxu0
      %s517 = scalar_lea.vmem %s1, 16
      %v518 = vld [vmem:[%s517] sm:$0xff]
      %519 = vrot.lane.b32.xlu0 %v198, 126
      %v520 = vpop.permute.xlu0 %519
      %521 = vrot.lane.b32.xlu0 %v205, 126
      %v522 = vpop.permute.xlu0 %521
      %523 = vrot.lane.b32.xlu0 %v199, 126
      %v524 = vpop.permute.xlu0 %523
      %vm525 = vcmask 1031168
      %v526 = vsel %vm525, %v520, %v522
      %v527 = vsel %vm525, %v522, %v524
      %v529 = vsel %vm215, %v518, 0
      %v531 = vsel %vm219, %v526, 0
      %v533 = vsel %vm219, %v527, 0
      %v535 = vsel %vm219, %v524, 0
      %537 = vmatprep.subr.mxu0 %v533
      %538 = vmatpush1.msra.mxu0 %v531
      %539 = vmatprep.subr.mxu0 0.0
      %540 = vmatpush1.msra.mxu0 0.0
      %541 = vmatprep.subr.mxu0 0.0
      %542 = vmatpush1.msra.mxu0 0.0
      %543 = vmatprep.subr.mxu0 0.0
      %544 = vmatpush1.msra.mxu0 0.0
      %545 = vmatprep.subr.mxu0 0.0
      %546 = vmatpush1.msra.mxu0 0.0
      %547 = vmatprep.subr.mxu0 0.0
      %548 = vmatpush1.msra.mxu0 0.0
      %549 = vmatprep.subr.mxu0 0.0
      %550 = vmatpush1.msra.mxu0 0.0
      %551 = vmatprep.subr.mxu0 0.0
      %552 = vmatpush1.msra.mxu0 0.0
      %553 = vmatprep.subr.mxu0 0.0
      %554 = vmatpush1.msra.mxu0 0.0
      %555 = vmatprep.subr.mxu0 0.0
      %556 = vmatpush1.msra.mxu0 0.0
      %557 = vmatprep.subr.mxu0 0.0
      %558 = vmatpush1.msra.mxu0 0.0
      %559 = vmatprep.subr.mxu0 0.0
      %560 = vmatpush1.msra.mxu0 0.0
      %561 = vmatprep.subr.mxu0 0.0
      %562 = vmatpush1.msra.mxu0 0.0
      %563 = vmatprep.subr.mxu0 0.0
      %564 = vmatpush1.msra.mxu0 0.0
      %565 = vmatprep.subr.mxu0 0.0
      %566 = vmatpush1.msra.mxu0 0.0
      %567 = vmatprep.subr.mxu0 0.0
      %568 = vmatpush1.msra.mxu0 0.0
      %569 = vmatprep.subr.mxu0 0.0
      %570 = vmatpush1.msra.mxu0 0.0
      %571 = vmatprep.subr.mxu0 0.0
      %572 = vmatpush1.msra.mxu0 0.0
      %573 = vmatprep.subr.mxu0 0.0
      %574 = vmatpush1.msra.mxu0 0.0
      %575 = vmatprep.subr.mxu0 0.0
      %576 = vmatpush1.msra.mxu0 0.0
      %577 = vmatprep.subr.mxu0 0.0
      %578 = vmatpush1.msra.mxu0 0.0
      %579 = vmatprep.subr.mxu0 0.0
      %580 = vmatpush1.msra.mxu0 0.0
      %581 = vmatprep.subr.mxu0 0.0
      %582 = vmatpush1.msra.mxu0 0.0
      %583 = vmatprep.subr.mxu0 0.0
      %584 = vmatpush1.msra.mxu0 0.0
      %585 = vmatprep.subr.mxu0 0.0
      %586 = vmatpush1.msra.mxu0 0.0
      %587 = vmatprep.subr.mxu0 0.0
      %588 = vmatpush1.msra.mxu0 0.0
      %589 = vmatprep.subr.mxu0 0.0
      %590 = vmatpush1.msra.mxu0 0.0
      %591 = vmatprep.subr.mxu0 0.0
      %592 = vmatpush1.msra.mxu0 0.0
      %593 = vmatprep.subr.mxu0 0.0
      %594 = vmatpush1.msra.mxu0 0.0
      %595 = vmatprep.subr.mxu0 0.0
      %596 = vmatpush1.msra.mxu0 0.0
      %597 = vmatprep.subr.mxu0 0.0
      %598 = vmatpush1.msra.mxu0 0.0
      %599 = vmatprep.subr.mxu0 0.0
      %600 = vmatpush1.msra.mxu0 0.0
      %601 = vmatprep.mubr.f32.mxu0 0.0
      %602 = vmatmul.mubr.f32.gmra.mrb[0].mxu0 %v529
      %v603 = vpop.f32.mrb[0].mxu0
      %v604 = vadd.f32 0.0, %v603
      %v605 = vpop.f32.mrb[0].mxu0
      %v606 = vadd.f32 0.0, %v605
      %607 = vdwg.mxu0
      %608 = vmatprep.subr.mxu0 0.0
      %609 = vmatpush1.msra.mxu0 %v535
      %610 = vmatprep.subr.mxu0 0.0
      %611 = vmatpush1.msra.mxu0 0.0
      %612 = vmatprep.subr.mxu0 0.0
      %613 = vmatpush1.msra.mxu0 0.0
      %614 = vmatprep.subr.mxu0 0.0
      %615 = vmatpush1.msra.mxu0 0.0
      %616 = vmatprep.subr.mxu0 0.0
      %617 = vmatpush1.msra.mxu0 0.0
      %618 = vmatprep.subr.mxu0 0.0
      %619 = vmatpush1.msra.mxu0 0.0
      %620 = vmatprep.subr.mxu0 0.0
      %621 = vmatpush1.msra.mxu0 0.0
      %622 = vmatprep.subr.mxu0 0.0
      %623 = vmatpush1.msra.mxu0 0.0
      %624 = vmatprep.subr.mxu0 0.0
      %625 = vmatpush1.msra.mxu0 0.0
      %626 = vmatprep.subr.mxu0 0.0
      %627 = vmatpush1.msra.mxu0 0.0
      %628 = vmatprep.subr.mxu0 0.0
      %629 = vmatpush1.msra.mxu0 0.0
      %630 = vmatprep.subr.mxu0 0.0
      %631 = vmatpush1.msra.mxu0 0.0
      %632 = vmatprep.subr.mxu0 0.0
      %633 = vmatpush1.msra.mxu0 0.0
      %634 = vmatprep.subr.mxu0 0.0
      %635 = vmatpush1.msra.mxu0 0.0
      %636 = vmatprep.subr.mxu0 0.0
      %637 = vmatpush1.msra.mxu0 0.0
      %638 = vmatprep.subr.mxu0 0.0
      %639 = vmatpush1.msra.mxu0 0.0
      %640 = vmatprep.subr.mxu0 0.0
      %641 = vmatpush1.msra.mxu0 0.0
      %642 = vmatprep.subr.mxu0 0.0
      %643 = vmatpush1.msra.mxu0 0.0
      %644 = vmatprep.subr.mxu0 0.0
      %645 = vmatpush1.msra.mxu0 0.0
      %646 = vmatprep.subr.mxu0 0.0
      %647 = vmatpush1.msra.mxu0 0.0
      %648 = vmatprep.subr.mxu0 0.0
      %649 = vmatpush1.msra.mxu0 0.0
      %650 = vmatprep.subr.mxu0 0.0
      %651 = vmatpush1.msra.mxu0 0.0
      %652 = vmatprep.subr.mxu0 0.0
      %653 = vmatpush1.msra.mxu0 0.0
      %654 = vmatprep.subr.mxu0 0.0
      %655 = vmatpush1.msra.mxu0 0.0
      %656 = vmatprep.subr.mxu0 0.0
      %657 = vmatpush1.msra.mxu0 0.0
      %658 = vmatprep.subr.mxu0 0.0
      %659 = vmatpush1.msra.mxu0 0.0
      %660 = vmatprep.subr.mxu0 0.0
      %661 = vmatpush1.msra.mxu0 0.0
      %662 = vmatprep.subr.mxu0 0.0
      %663 = vmatpush1.msra.mxu0 0.0
      %664 = vmatprep.subr.mxu0 0.0
      %665 = vmatpush1.msra.mxu0 0.0
      %666 = vmatprep.subr.mxu0 0.0
      %667 = vmatpush1.msra.mxu0 0.0
      %668 = vmatprep.subr.mxu0 0.0
      %669 = vmatpush1.msra.mxu0 0.0
      %670 = vmatprep.subr.mxu0 0.0
      %671 = vmatpush1.msra.mxu0 0.0
      %672 = vmatprep.mubr.f32.mxu0 0.0
      %673 = vmatmul.mubr.f32.gmra.mrb[0].mxu0 %v529
      %v674 = vpop.f32.mrb[0].mxu0
      %v675 = vadd.f32 0.0, %v674
      %v676 = vpop.f32.mrb[0].mxu0
      %677 = vdwg.mxu0
      %v678 = vadd.f32 %v443, %v604
      %v679 = vadd.f32 %v445, %v606
      %v680 = vadd.f32 %v514, %v675
      %s681 = scalar_lea.vmem %s1, 24
      %v682 = vld [vmem:[%s681] sm:$0xff]
      %683 = vrot.lane.b32.xlu0 %v198, 110
      %v684 = vpop.permute.xlu0 %683
      %685 = vrot.lane.b32.xlu0 %v205, 110
      %v686 = vpop.permute.xlu0 %685
      %687 = vrot.lane.b32.xlu0 %v199, 110
      %v688 = vpop.permute.xlu0 %687
      %vm689 = vcmask 900096
      %v690 = vsel %vm689, %v684, %v686
      %v691 = vsel %vm689, %v686, %v688
      %v693 = vsel %vm215, %v682, 0
      %v695 = vsel %vm219, %v690, 0
      %v697 = vsel %vm219, %v691, 0
      %v699 = vsel %vm219, %v688, 0
      %701 = vmatprep.subr.mxu0 %v697
      %702 = vmatpush1.msra.mxu0 %v695
      %703 = vmatprep.subr.mxu0 0.0
      %704 = vmatpush1.msra.mxu0 0.0
      %705 = vmatprep.subr.mxu0 0.0
      %706 = vmatpush1.msra.mxu0 0.0
      %707 = vmatprep.subr.mxu0 0.0
      %708 = vmatpush1.msra.mxu0 0.0
      %709 = vmatprep.subr.mxu0 0.0
      %710 = vmatpush1.msra.mxu0 0.0
      %711 = vmatprep.subr.mxu0 0.0
      %712 = vmatpush1.msra.mxu0 0.0
      %713 = vmatprep.subr.mxu0 0.0
      %714 = vmatpush1.msra.mxu0 0.0
      %715 = vmatprep.subr.mxu0 0.0
      %716 = vmatpush1.msra.mxu0 0.0
      %717 = vmatprep.subr.mxu0 0.0
      %718 = vmatpush1.msra.mxu0 0.0
      %719 = vmatprep.subr.mxu0 0.0
      %720 = vmatpush1.msra.mxu0 0.0
      %721 = vmatprep.subr.mxu0 0.0
      %722 = vmatpush1.msra.mxu0 0.0
      %723 = vmatprep.subr.mxu0 0.0
      %724 = vmatpush1.msra.mxu0 0.0
      %725 = vmatprep.subr.mxu0 0.0
      %726 = vmatpush1.msra.mxu0 0.0
      %727 = vmatprep.subr.mxu0 0.0
      %728 = vmatpush1.msra.mxu0 0.0
      %729 = vmatprep.subr.mxu0 0.0
      %730 = vmatpush1.msra.mxu0 0.0
      %731 = vmatprep.subr.mxu0 0.0
      %732 = vmatpush1.msra.mxu0 0.0
      %733 = vmatprep.subr.mxu0 0.0
      %734 = vmatpush1.msra.mxu0 0.0
      %735 = vmatprep.subr.mxu0 0.0
      %736 = vmatpush1.msra.mxu0 0.0
      %737 = vmatprep.subr.mxu0 0.0
      %738 = vmatpush1.msra.mxu0 0.0
      %739 = vmatprep.subr.mxu0 0.0
      %740 = vmatpush1.msra.mxu0 0.0
      %741 = vmatprep.subr.mxu0 0.0
      %742 = vmatpush1.msra.mxu0 0.0
      %743 = vmatprep.subr.mxu0 0.0
      %744 = vmatpush1.msra.mxu0 0.0
      %745 = vmatprep.subr.mxu0 0.0
      %746 = vmatpush1.msra.mxu0 0.0
      %747 = vmatprep.subr.mxu0 0.0
      %748 = vmatpush1.msra.mxu0 0.0
      %749 = vmatprep.subr.mxu0 0.0
      %750 = vmatpush1.msra.mxu0 0.0
      %751 = vmatprep.subr.mxu0 0.0
      %752 = vmatpush1.msra.mxu0 0.0
      %753 = vmatprep.subr.mxu0 0.0
      %754 = vmatpush1.msra.mxu0 0.0
      %755 = vmatprep.subr.mxu0 0.0
      %756 = vmatpush1.msra.mxu0 0.0
      %757 = vmatprep.subr.mxu0 0.0
      %758 = vmatpush1.msra.mxu0 0.0
      %759 = vmatprep.subr.mxu0 0.0
      %760 = vmatpush1.msra.mxu0 0.0
      %761 = vmatprep.subr.mxu0 0.0
      %762 = vmatpush1.msra.mxu0 0.0
      %763 = vmatprep.subr.mxu0 0.0
      %764 = vmatpush1.msra.mxu0 0.0
      %765 = vmatprep.mubr.f32.mxu0 0.0
      %766 = vmatmul.mubr.f32.gmra.mrb[0].mxu0 %v693
      %v767 = vpop.f32.mrb[0].mxu0
      %v768 = vadd.f32 0.0, %v767
      %v769 = vpop.f32.mrb[0].mxu0
      %v770 = vadd.f32 0.0, %v769
      %771 = vdwg.mxu0
      %772 = vmatprep.subr.mxu0 0.0
      %773 = vmatpush1.msra.mxu0 %v699
      %774 = vmatprep.subr.mxu0 0.0
      %775 = vmatpush1.msra.mxu0 0.0
      %776 = vmatprep.subr.mxu0 0.0
      %777 = vmatpush1.msra.mxu0 0.0
      %778 = vmatprep.subr.mxu0 0.0
      %779 = vmatpush1.msra.mxu0 0.0
      %780 = vmatprep.subr.mxu0 0.0
      %781 = vmatpush1.msra.mxu0 0.0
      %782 = vmatprep.subr.mxu0 0.0
      %783 = vmatpush1.msra.mxu0 0.0
      %784 = vmatprep.subr.mxu0 0.0
      %785 = vmatpush1.msra.mxu0 0.0
      %786 = vmatprep.subr.mxu0 0.0
      %787 = vmatpush1.msra.mxu0 0.0
      %788 = vmatprep.subr.mxu0 0.0
      %789 = vmatpush1.msra.mxu0 0.0
      %790 = vmatprep.subr.mxu0 0.0
      %791 = vmatpush1.msra.mxu0 0.0
      %792 = vmatprep.subr.mxu0 0.0
      %793 = vmatpush1.msra.mxu0 0.0
      %794 = vmatprep.subr.mxu0 0.0
      %795 = vmatpush1.msra.mxu0 0.0
      %796 = vmatprep.subr.mxu0 0.0
      %797 = vmatpush1.msra.mxu0 0.0
      %798 = vmatprep.subr.mxu0 0.0
      %799 = vmatpush1.msra.mxu0 0.0
      %800 = vmatprep.subr.mxu0 0.0
      %801 = vmatpush1.msra.mxu0 0.0
      %802 = vmatprep.subr.mxu0 0.0
      %803 = vmatpush1.msra.mxu0 0.0
      %804 = vmatprep.subr.mxu0 0.0
      %805 = vmatpush1.msra.mxu0 0.0
      %806 = vmatprep.subr.mxu0 0.0
      %807 = vmatpush1.msra.mxu0 0.0
      %808 = vmatprep.subr.mxu0 0.0
      %809 = vmatpush1.msra.mxu0 0.0
      %810 = vmatprep.subr.mxu0 0.0
      %811 = vmatpush1.msra.mxu0 0.0
      %812 = vmatprep.subr.mxu0 0.0
      %813 = vmatpush1.msra.mxu0 0.0
      %814 = vmatprep.subr.mxu0 0.0
      %815 = vmatpush1.msra.mxu0 0.0
      %816 = vmatprep.subr.mxu0 0.0
      %817 = vmatpush1.msra.mxu0 0.0
      %818 = vmatprep.subr.mxu0 0.0
      %819 = vmatpush1.msra.mxu0 0.0
      %820 = vmatprep.subr.mxu0 0.0
      %821 = vmatpush1.msra.mxu0 0.0
      %822 = vmatprep.subr.mxu0 0.0
      %823 = vmatpush1.msra.mxu0 0.0
      %824 = vmatprep.subr.mxu0 0.0
      %825 = vmatpush1.msra.mxu0 0.0
      %826 = vmatprep.subr.mxu0 0.0
      %827 = vmatpush1.msra.mxu0 0.0
      %828 = vmatprep.subr.mxu0 0.0
      %829 = vmatpush1.msra.mxu0 0.0
      %830 = vmatprep.subr.mxu0 0.0
      %831 = vmatpush1.msra.mxu0 0.0
      %832 = vmatprep.subr.mxu0 0.0
      %833 = vmatpush1.msra.mxu0 0.0
      %834 = vmatprep.subr.mxu0 0.0
      %835 = vmatpush1.msra.mxu0 0.0
      %836 = vmatprep.mubr.f32.mxu0 0.0
      %837 = vmatmul.mubr.f32.gmra.mrb[0].mxu0 %v693
      %v838 = vpop.f32.mrb[0].mxu0
      %v839 = vadd.f32 0.0, %v838
      %v840 = vpop.f32.mrb[0].mxu0
      %841 = vdwg.mxu0
      %v842 = vadd.f32 %v678, %v768
      %v843 = vadd.f32 %v679, %v770
      %v844 = vadd.f32 %v680, %v839
      %s845 = scalar_lea.vmem %s1, 32
      %v846 = vld [vmem:[%s845] sm:$0xff]
      %847 = vrot.lane.b32.xlu0 %v198, 109
      %v848 = vpop.permute.xlu0 %847
      %849 = vrot.lane.b32.xlu0 %v205, 109
      %v850 = vpop.permute.xlu0 %849
      %851 = vrot.lane.b32.xlu0 %v199, 109
      %v852 = vpop.permute.xlu0 %851
      %vm853 = vcmask 891904
      %v854 = vsel %vm853, %v848, %v850
      %v855 = vsel %vm853, %v850, %v852
      %v857 = vsel %vm215, %v846, 0
      %v859 = vsel %vm219, %v854, 0
      %v861 = vsel %vm219, %v855, 0
      %v863 = vsel %vm219, %v852, 0
      %865 = vmatprep.subr.mxu0 %v861
      %866 = vmatpush1.msra.mxu0 %v859
      %867 = vmatprep.subr.mxu0 0.0
      %868 = vmatpush1.msra.mxu0 0.0
      %869 = vmatprep.subr.mxu0 0.0
      %870 = vmatpush1.msra.mxu0 0.0
      %871 = vmatprep.subr.mxu0 0.0
      %872 = vmatpush1.msra.mxu0 0.0
      %873 = vmatprep.subr.mxu0 0.0
      %874 = vmatpush1.msra.mxu0 0.0
      %875 = vmatprep.subr.mxu0 0.0
      %876 = vmatpush1.msra.mxu0 0.0
      %877 = vmatprep.subr.mxu0 0.0
      %878 = vmatpush1.msra.mxu0 0.0
      %879 = vmatprep.subr.mxu0 0.0
      %880 = vmatpush1.msra.mxu0 0.0
      %881 = vmatprep.subr.mxu0 0.0
      %882 = vmatpush1.msra.mxu0 0.0
      %883 = vmatprep.subr.mxu0 0.0
      %884 = vmatpush1.msra.mxu0 0.0
      %885 = vmatprep.subr.mxu0 0.0
      %886 = vmatpush1.msra.mxu0 0.0
      %887 = vmatprep.subr.mxu0 0.0
      %888 = vmatpush1.msra.mxu0 0.0
      %889 = vmatprep.subr.mxu0 0.0
      %890 = vmatpush1.msra.mxu0 0.0
      %891 = vmatprep.subr.mxu0 0.0
      %892 = vmatpush1.msra.mxu0 0.0
      %893 = vmatprep.subr.mxu0 0.0
      %894 = vmatpush1.msra.mxu0 0.0
      %895 = vmatprep.subr.mxu0 0.0
      %896 = vmatpush1.msra.mxu0 0.0
      %897 = vmatprep.subr.mxu0 0.0
      %898 = vmatpush1.msra.mxu0 0.0
      %899 = vmatprep.subr.mxu0 0.0
      %900 = vmatpush1.msra.mxu0 0.0
      %901 = vmatprep.subr.mxu0 0.0
      %902 = vmatpush1.msra.mxu0 0.0
      %903 = vmatprep.subr.mxu0 0.0
      %904 = vmatpush1.msra.mxu0 0.0
      %905 = vmatprep.subr.mxu0 0.0
      %906 = vmatpush1.msra.mxu0 0.0
      %907 = vmatprep.subr.mxu0 0.0
      %908 = vmatpush1.msra.mxu0 0.0
      %909 = vmatprep.subr.mxu0 0.0
      %910 = vmatpush1.msra.mxu0 0.0
      %911 = vmatprep.subr.mxu0 0.0
      %912 = vmatpush1.msra.mxu0 0.0
      %913 = vmatprep.subr.mxu0 0.0
      %914 = vmatpush1.msra.mxu0 0.0
      %915 = vmatprep.subr.mxu0 0.0
      %916 = vmatpush1.msra.mxu0 0.0
      %917 = vmatprep.subr.mxu0 0.0
      %918 = vmatpush1.msra.mxu0 0.0
      %919 = vmatprep.subr.mxu0 0.0
      %920 = vmatpush1.msra.mxu0 0.0
      %921 = vmatprep.subr.mxu0 0.0
      %922 = vmatpush1.msra.mxu0 0.0
      %923 = vmatprep.subr.mxu0 0.0
      %924 = vmatpush1.msra.mxu0 0.0
      %925 = vmatprep.subr.mxu0 0.0
      %926 = vmatpush1.msra.mxu0 0.0
      %927 = vmatprep.subr.mxu0 0.0
      %928 = vmatpush1.msra.mxu0 0.0
      %929 = vmatprep.mubr.f32.mxu0 0.0
      %930 = vmatmul.mubr.f32.gmra.mrb[0].mxu0 %v857
      %v931 = vpop.f32.mrb[0].mxu0
      %v932 = vadd.f32 0.0, %v931
      %v933 = vpop.f32.mrb[0].mxu0
      %v934 = vadd.f32 0.0, %v933
      %935 = vdwg.mxu0
      %936 = vmatprep.subr.mxu0 0.0
      %937 = vmatpush1.msra.mxu0 %v863
      %938 = vmatprep.subr.mxu0 0.0
      %939 = vmatpush1.msra.mxu0 0.0
      %940 = vmatprep.subr.mxu0 0.0
      %941 = vmatpush1.msra.mxu0 0.0
      %942 = vmatprep.subr.mxu0 0.0
      %943 = vmatpush1.msra.mxu0 0.0
      %944 = vmatprep.subr.mxu0 0.0
      %945 = vmatpush1.msra.mxu0 0.0
      %946 = vmatprep.subr.mxu0 0.0
      %947 = vmatpush1.msra.mxu0 0.0
      %948 = vmatprep.subr.mxu0 0.0
      %949 = vmatpush1.msra.mxu0 0.0
      %950 = vmatprep.subr.mxu0 0.0
      %951 = vmatpush1.msra.mxu0 0.0
      %952 = vmatprep.subr.mxu0 0.0
      %953 = vmatpush1.msra.mxu0 0.0
      %954 = vmatprep.subr.mxu0 0.0
      %955 = vmatpush1.msra.mxu0 0.0
      %956 = vmatprep.subr.mxu0 0.0
      %957 = vmatpush1.msra.mxu0 0.0
      %958 = vmatprep.subr.mxu0 0.0
      %959 = vmatpush1.msra.mxu0 0.0
      %960 = vmatprep.subr.mxu0 0.0
      %961 = vmatpush1.msra.mxu0 0.0
      %962 = vmatprep.subr.mxu0 0.0
      %963 = vmatpush1.msra.mxu0 0.0
      %964 = vmatprep.subr.mxu0 0.0
      %965 = vmatpush1.msra.mxu0 0.0
      %966 = vmatprep.subr.mxu0 0.0
      %967 = vmatpush1.msra.mxu0 0.0
      %968 = vmatprep.subr.mxu0 0.0
      %969 = vmatpush1.msra.mxu0 0.0
      %970 = vmatprep.subr.mxu0 0.0
      %971 = vmatpush1.msra.mxu0 0.0
      %972 = vmatprep.subr.mxu0 0.0
      %973 = vmatpush1.msra.mxu0 0.0
      %974 = vmatprep.subr.mxu0 0.0
      %975 = vmatpush1.msra.mxu0 0.0
      %976 = vmatprep.subr.mxu0 0.0
      %977 = vmatpush1.msra.mxu0 0.0
      %978 = vmatprep.subr.mxu0 0.0
      %979 = vmatpush1.msra.mxu0 0.0
      %980 = vmatprep.subr.mxu0 0.0
      %981 = vmatpush1.msra.mxu0 0.0
      %982 = vmatprep.subr.mxu0 0.0
      %983 = vmatpush1.msra.mxu0 0.0
      %984 = vmatprep.subr.mxu0 0.0
      %985 = vmatpush1.msra.mxu0 0.0
      %986 = vmatprep.subr.mxu0 0.0
      %987 = vmatpush1.msra.mxu0 0.0
      %988 = vmatprep.subr.mxu0 0.0
      %989 = vmatpush1.msra.mxu0 0.0
      %990 = vmatprep.subr.mxu0 0.0
      %991 = vmatpush1.msra.mxu0 0.0
      %992 = vmatprep.subr.mxu0 0.0
      %993 = vmatpush1.msra.mxu0 0.0
      %994 = vmatprep.subr.mxu0 0.0
      %995 = vmatpush1.msra.mxu0 0.0
      %996 = vmatprep.subr.mxu0 0.0
      %997 = vmatpush1.msra.mxu0 0.0
      %998 = vmatprep.subr.mxu0 0.0
      %999 = vmatpush1.msra.mxu0 0.0
      %1000 = vmatprep.mubr.f32.mxu0 0.0
      %1001 = vmatmul.mubr.f32.gmra.mrb[0].mxu0 %v857
      %v1002 = vpop.f32.mrb[0].mxu0
      %v1003 = vadd.f32 0.0, %v1002
      %v1004 = vpop.f32.mrb[0].mxu0
      %1005 = vdwg.mxu0
      %v1006 = vadd.f32 %v842, %v932
      %v1007 = vadd.f32 %v843, %v934
      %v1008 = vadd.f32 %v844, %v1003
      %s1009 = scalar_lea.vmem %s1, 40
      %v1010 = vld [vmem:[%s1009] sm:$0xff]
      %1011 = vrot.lane.b32.xlu0 %v198, 108
      %v1012 = vpop.permute.xlu0 %1011
      %1013 = vrot.lane.b32.xlu0 %v205, 108
      %v1014 = vpop.permute.xlu0 %1013
      %1015 = vrot.lane.b32.xlu0 %v199, 108
      %v1016 = vpop.permute.xlu0 %1015
      %vm1017 = vcmask 883712
      %v1018 = vsel %vm1017, %v1012, %v1014
      %v1019 = vsel %vm1017, %v1014, %v1016
      %v1021 = vsel %vm215, %v1010, 0
      %v1023 = vsel %vm219, %v1018, 0
      %v1025 = vsel %vm219, %v1019, 0
      %v1027 = vsel %vm219, %v1016, 0
      %1029 = vmatprep.subr.mxu0 %v1025
      %1030 = vmatpush1.msra.mxu0 %v1023
      %1031 = vmatprep.subr.mxu0 0.0
      %1032 = vmatpush1.msra.mxu0 0.0
      %1033 = vmatprep.subr.mxu0 0.0
      %1034 = vmatpush1.msra.mxu0 0.0
      %1035 = vmatprep.subr.mxu0 0.0
      %1036 = vmatpush1.msra.mxu0 0.0
      %1037 = vmatprep.subr.mxu0 0.0
      %1038 = vmatpush1.msra.mxu0 0.0
      %1039 = vmatprep.subr.mxu0 0.0
      %1040 = vmatpush1.msra.mxu0 0.0
      %1041 = vmatprep.subr.mxu0 0.0
      %1042 = vmatpush1.msra.mxu0 0.0
      %1043 = vmatprep.subr.mxu0 0.0
      %1044 = vmatpush1.msra.mxu0 0.0
      %1045 = vmatprep.subr.mxu0 0.0
      %1046 = vmatpush1.msra.mxu0 0.0
      %1047 = vmatprep.subr.mxu0 0.0
      %1048 = vmatpush1.msra.mxu0 0.0
      %1049 = vmatprep.subr.mxu0 0.0
      %1050 = vmatpush1.msra.mxu0 0.0
      %1051 = vmatprep.subr.mxu0 0.0
      %1052 = vmatpush1.msra.mxu0 0.0
      %1053 = vmatprep.subr.mxu0 0.0
      %1054 = vmatpush1.msra.mxu0 0.0
      %1055 = vmatprep.subr.mxu0 0.0
      %1056 = vmatpush1.msra.mxu0 0.0
      %1057 = vmatprep.subr.mxu0 0.0
      %1058 = vmatpush1.msra.mxu0 0.0
      %1059 = vmatprep.subr.mxu0 0.0
      %1060 = vmatpush1.msra.mxu0 0.0
      %1061 = vmatprep.subr.mxu0 0.0
      %1062 = vmatpush1.msra.mxu0 0.0
      %1063 = vmatprep.subr.mxu0 0.0
      %1064 = vmatpush1.msra.mxu0 0.0
      %1065 = vmatprep.subr.mxu0 0.0
      %1066 = vmatpush1.msra.mxu0 0.0
      %1067 = vmatprep.subr.mxu0 0.0
      %1068 = vmatpush1.msra.mxu0 0.0
      %1069 = vmatprep.subr.mxu0 0.0
      %1070 = vmatpush1.msra.mxu0 0.0
      %1071 = vmatprep.subr.mxu0 0.0
      %1072 = vmatpush1.msra.mxu0 0.0
      %1073 = vmatprep.subr.mxu0 0.0
      %1074 = vmatpush1.msra.mxu0 0.0
      %1075 = vmatprep.subr.mxu0 0.0
      %1076 = vmatpush1.msra.mxu0 0.0
      %1077 = vmatprep.subr.mxu0 0.0
      %1078 = vmatpush1.msra.mxu0 0.0
      %1079 = vmatprep.subr.mxu0 0.0
      %1080 = vmatpush1.msra.mxu0 0.0
      %1081 = vmatprep.subr.mxu0 0.0
      %1082 = vmatpush1.msra.mxu0 0.0
      %1083 = vmatprep.subr.mxu0 0.0
      %1084 = vmatpush1.msra.mxu0 0.0
      %1085 = vmatprep.subr.mxu0 0.0
      %1086 = vmatpush1.msra.mxu0 0.0
      %1087 = vmatprep.subr.mxu0 0.0
      %1088 = vmatpush1.msra.mxu0 0.0
      %1089 = vmatprep.subr.mxu0 0.0
      %1090 = vmatpush1.msra.mxu0 0.0
      %1091 = vmatprep.subr.mxu0 0.0
      %1092 = vmatpush1.msra.mxu0 0.0
      %1093 = vmatprep.mubr.f32.mxu0 0.0
      %1094 = vmatmul.mubr.f32.gmra.mrb[0].mxu0 %v1021
      %v1095 = vpop.f32.mrb[0].mxu0
      %v1096 = vadd.f32 0.0, %v1095
      %v1097 = vpop.f32.mrb[0].mxu0
      %v1098 = vadd.f32 0.0, %v1097
      %1099 = vdwg.mxu0
      %1100 = vmatprep.subr.mxu0 0.0
      %1101 = vmatpush1.msra.mxu0 %v1027
      %1102 = vmatprep.subr.mxu0 0.0
      %1103 = vmatpush1.msra.mxu0 0.0
      %1104 = vmatprep.subr.mxu0 0.0
      %1105 = vmatpush1.msra.mxu0 0.0
      %1106 = vmatprep.subr.mxu0 0.0
      %1107 = vmatpush1.msra.mxu0 0.0
      %1108 = vmatprep.subr.mxu0 0.0
      %1109 = vmatpush1.msra.mxu0 0.0
      %1110 = vmatprep.subr.mxu0 0.0
      %1111 = vmatpush1.msra.mxu0 0.0
      %1112 = vmatprep.subr.mxu0 0.0
      %1113 = vmatpush1.msra.mxu0 0.0
      %1114 = vmatprep.subr.mxu0 0.0
      %1115 = vmatpush1.msra.mxu0 0.0
      %1116 = vmatprep.subr.mxu0 0.0
      %1117 = vmatpush1.msra.mxu0 0.0
      %1118 = vmatprep.subr.mxu0 0.0
      %1119 = vmatpush1.msra.mxu0 0.0
      %1120 = vmatprep.subr.mxu0 0.0
      %1121 = vmatpush1.msra.mxu0 0.0
      %1122 = vmatprep.subr.mxu0 0.0
      %1123 = vmatpush1.msra.mxu0 0.0
      %1124 = vmatprep.subr.mxu0 0.0
      %1125 = vmatpush1.msra.mxu0 0.0
      %1126 = vmatprep.subr.mxu0 0.0
      %1127 = vmatpush1.msra.mxu0 0.0
      %1128 = vmatprep.subr.mxu0 0.0
      %1129 = vmatpush1.msra.mxu0 0.0
      %1130 = vmatprep.subr.mxu0 0.0
      %1131 = vmatpush1.msra.mxu0 0.0
      %1132 = vmatprep.subr.mxu0 0.0
      %1133 = vmatpush1.msra.mxu0 0.0
      %1134 = vmatprep.subr.mxu0 0.0
      %1135 = vmatpush1.msra.mxu0 0.0
      %1136 = vmatprep.subr.mxu0 0.0
      %1137 = vmatpush1.msra.mxu0 0.0
      %1138 = vmatprep.subr.mxu0 0.0
      %1139 = vmatpush1.msra.mxu0 0.0
      %1140 = vmatprep.subr.mxu0 0.0
      %1141 = vmatpush1.msra.mxu0 0.0
      %1142 = vmatprep.subr.mxu0 0.0
      %1143 = vmatpush1.msra.mxu0 0.0
      %1144 = vmatprep.subr.mxu0 0.0
      %1145 = vmatpush1.msra.mxu0 0.0
      %1146 = vmatprep.subr.mxu0 0.0
      %1147 = vmatpush1.msra.mxu0 0.0
      %1148 = vmatprep.subr.mxu0 0.0
      %1149 = vmatpush1.msra.mxu0 0.0
      %1150 = vmatprep.subr.mxu0 0.0
      %1151 = vmatpush1.msra.mxu0 0.0
      %1152 = vmatprep.subr.mxu0 0.0
      %1153 = vmatpush1.msra.mxu0 0.0
      %1154 = vmatprep.subr.mxu0 0.0
      %1155 = vmatpush1.msra.mxu0 0.0
      %1156 = vmatprep.subr.mxu0 0.0
      %1157 = vmatpush1.msra.mxu0 0.0
      %1158 = vmatprep.subr.mxu0 0.0
      %1159 = vmatpush1.msra.mxu0 0.0
      %1160 = vmatprep.subr.mxu0 0.0
      %1161 = vmatpush1.msra.mxu0 0.0
      %1162 = vmatprep.subr.mxu0 0.0
      %1163 = vmatpush1.msra.mxu0 0.0
      %1164 = vmatprep.mubr.f32.mxu0 0.0
      %1165 = vmatmul.mubr.f32.gmra.mrb[0].mxu0 %v1021
      %v1166 = vpop.f32.mrb[0].mxu0
      %v1167 = vadd.f32 0.0, %v1166
      %v1168 = vpop.f32.mrb[0].mxu0
      %1169 = vdwg.mxu0
      %v1170 = vadd.f32 %v1006, %v1096
      %v1171 = vadd.f32 %v1007, %v1098
      %v1172 = vadd.f32 %v1008, %v1167
      %s1173 = scalar_lea.vmem %s1, 48
      %v1174 = vld [vmem:[%s1173] sm:$0xff]
      %1175 = vrot.lane.b32.xlu0 %v198, 92
      %v1176 = vpop.permute.xlu0 %1175
      %1177 = vrot.lane.b32.xlu0 %v205, 92
      %v1178 = vpop.permute.xlu0 %1177
      %1179 = vrot.lane.b32.xlu0 %v199, 92
      %v1180 = vpop.permute.xlu0 %1179
      %vm1181 = vcmask 752640
      %v1182 = vsel %vm1181, %v1176, %v1178
      %v1183 = vsel %vm1181, %v1178, %v1180
      %v1185 = vsel %vm215, %v1174, 0
      %v1187 = vsel %vm219, %v1182, 0
      %v1189 = vsel %vm219, %v1183, 0
      %v1191 = vsel %vm219, %v1180, 0
      %1193 = vmatprep.subr.mxu0 %v1189
      %1194 = vmatpush1.msra.mxu0 %v1187
      %1195 = vmatprep.subr.mxu0 0.0
      %1196 = vmatpush1.msra.mxu0 0.0
      %1197 = vmatprep.subr.mxu0 0.0
      %1198 = vmatpush1.msra.mxu0 0.0
      %1199 = vmatprep.subr.mxu0 0.0
      %1200 = vmatpush1.msra.mxu0 0.0
      %1201 = vmatprep.subr.mxu0 0.0
      %1202 = vmatpush1.msra.mxu0 0.0
      %1203 = vmatprep.subr.mxu0 0.0
      %1204 = vmatpush1.msra.mxu0 0.0
      %1205 = vmatprep.subr.mxu0 0.0
      %1206 = vmatpush1.msra.mxu0 0.0
      %1207 = vmatprep.subr.mxu0 0.0
      %1208 = vmatpush1.msra.mxu0 0.0
      %1209 = vmatprep.subr.mxu0 0.0
      %1210 = vmatpush1.msra.mxu0 0.0
      %1211 = vmatprep.subr.mxu0 0.0
      %1212 = vmatpush1.msra.mxu0 0.0
      %1213 = vmatprep.subr.mxu0 0.0
      %1214 = vmatpush1.msra.mxu0 0.0
      %1215 = vmatprep.subr.mxu0 0.0
      %1216 = vmatpush1.msra.mxu0 0.0
      %1217 = vmatprep.subr.mxu0 0.0
      %1218 = vmatpush1.msra.mxu0 0.0
      %1219 = vmatprep.subr.mxu0 0.0
      %1220 = vmatpush1.msra.mxu0 0.0
      %1221 = vmatprep.subr.mxu0 0.0
      %1222 = vmatpush1.msra.mxu0 0.0
      %1223 = vmatprep.subr.mxu0 0.0
      %1224 = vmatpush1.msra.mxu0 0.0
      %1225 = vmatprep.subr.mxu0 0.0
      %1226 = vmatpush1.msra.mxu0 0.0
      %1227 = vmatprep.subr.mxu0 0.0
      %1228 = vmatpush1.msra.mxu0 0.0
      %1229 = vmatprep.subr.mxu0 0.0
      %1230 = vmatpush1.msra.mxu0 0.0
      %1231 = vmatprep.subr.mxu0 0.0
      %1232 = vmatpush1.msra.mxu0 0.0
      %1233 = vmatprep.subr.mxu0 0.0
      %1234 = vmatpush1.msra.mxu0 0.0
      %1235 = vmatprep.subr.mxu0 0.0
      %1236 = vmatpush1.msra.mxu0 0.0
      %1237 = vmatprep.subr.mxu0 0.0
      %1238 = vmatpush1.msra.mxu0 0.0
      %1239 = vmatprep.subr.mxu0 0.0
      %1240 = vmatpush1.msra.mxu0 0.0
      %1241 = vmatprep.subr.mxu0 0.0
      %1242 = vmatpush1.msra.mxu0 0.0
      %1243 = vmatprep.subr.mxu0 0.0
      %1244 = vmatpush1.msra.mxu0 0.0
      %1245 = vmatprep.subr.mxu0 0.0
      %1246 = vmatpush1.msra.mxu0 0.0
      %1247 = vmatprep.subr.mxu0 0.0
      %1248 = vmatpush1.msra.mxu0 0.0
      %1249 = vmatprep.subr.mxu0 0.0
      %1250 = vmatpush1.msra.mxu0 0.0
      %1251 = vmatprep.subr.mxu0 0.0
      %1252 = vmatpush1.msra.mxu0 0.0
      %1253 = vmatprep.subr.mxu0 0.0
      %1254 = vmatpush1.msra.mxu0 0.0
      %1255 = vmatprep.subr.mxu0 0.0
      %1256 = vmatpush1.msra.mxu0 0.0
      %1257 = vmatprep.mubr.f32.mxu0 0.0
      %1258 = vmatmul.mubr.f32.gmra.mrb[0].mxu0 %v1185
      %v1259 = vpop.f32.mrb[0].mxu0
      %v1260 = vadd.f32 0.0, %v1259
      %v1261 = vpop.f32.mrb[0].mxu0
      %v1262 = vadd.f32 0.0, %v1261
      %1263 = vdwg.mxu0
      %1264 = vmatprep.subr.mxu0 0.0
      %1265 = vmatpush1.msra.mxu0 %v1191
      %1266 = vmatprep.subr.mxu0 0.0
      %1267 = vmatpush1.msra.mxu0 0.0
      %1268 = vmatprep.subr.mxu0 0.0
      %1269 = vmatpush1.msra.mxu0 0.0
      %1270 = vmatprep.subr.mxu0 0.0
      %1271 = vmatpush1.msra.mxu0 0.0
      %1272 = vmatprep.subr.mxu0 0.0
      %1273 = vmatpush1.msra.mxu0 0.0
      %1274 = vmatprep.subr.mxu0 0.0
      %1275 = vmatpush1.msra.mxu0 0.0
      %1276 = vmatprep.subr.mxu0 0.0
      %1277 = vmatpush1.msra.mxu0 0.0
      %1278 = vmatprep.subr.mxu0 0.0
      %1279 = vmatpush1.msra.mxu0 0.0
      %1280 = vmatprep.subr.mxu0 0.0
      %1281 = vmatpush1.msra.mxu0 0.0
      %1282 = vmatprep.subr.mxu0 0.0
      %1283 = vmatpush1.msra.mxu0 0.0
      %1284 = vmatprep.subr.mxu0 0.0
      %1285 = vmatpush1.msra.mxu0 0.0
      %1286 = vmatprep.subr.mxu0 0.0
      %1287 = vmatpush1.msra.mxu0 0.0
      %1288 = vmatprep.subr.mxu0 0.0
      %1289 = vmatpush1.msra.mxu0 0.0
      %1290 = vmatprep.subr.mxu0 0.0
      %1291 = vmatpush1.msra.mxu0 0.0
      %1292 = vmatprep.subr.mxu0 0.0
      %1293 = vmatpush1.msra.mxu0 0.0
      %1294 = vmatprep.subr.mxu0 0.0
      %1295 = vmatpush1.msra.mxu0 0.0
      %1296 = vmatprep.subr.mxu0 0.0
      %1297 = vmatpush1.msra.mxu0 0.0
      %1298 = vmatprep.subr.mxu0 0.0
      %1299 = vmatpush1.msra.mxu0 0.0
      %1300 = vmatprep.subr.mxu0 0.0
      %1301 = vmatpush1.msra.mxu0 0.0
      %1302 = vmatprep.subr.mxu0 0.0
      %1303 = vmatpush1.msra.mxu0 0.0
      %1304 = vmatprep.subr.mxu0 0.0
      %1305 = vmatpush1.msra.mxu0 0.0
      %1306 = vmatprep.subr.mxu0 0.0
      %1307 = vmatpush1.msra.mxu0 0.0
      %1308 = vmatprep.subr.mxu0 0.0
      %1309 = vmatpush1.msra.mxu0 0.0
      %1310 = vmatprep.subr.mxu0 0.0
      %1311 = vmatpush1.msra.mxu0 0.0
      %1312 = vmatprep.subr.mxu0 0.0
      %1313 = vmatpush1.msra.mxu0 0.0
      %1314 = vmatprep.subr.mxu0 0.0
      %1315 = vmatpush1.msra.mxu0 0.0
      %1316 = vmatprep.subr.mxu0 0.0
      %1317 = vmatpush1.msra.mxu0 0.0
      %1318 = vmatprep.subr.mxu0 0.0
      %1319 = vmatpush1.msra.mxu0 0.0
      %1320 = vmatprep.subr.mxu0 0.0
      %1321 = vmatpush1.msra.mxu0 0.0
      %1322 = vmatprep.subr.mxu0 0.0
      %1323 = vmatpush1.msra.mxu0 0.0
      %1324 = vmatprep.subr.mxu0 0.0
      %1325 = vmatpush1.msra.mxu0 0.0
      %1326 = vmatprep.subr.mxu0 0.0
      %1327 = vmatpush1.msra.mxu0 0.0
      %1328 = vmatprep.mubr.f32.mxu0 0.0
      %1329 = vmatmul.mubr.f32.gmra.mrb[0].mxu0 %v1185
      %v1330 = vpop.f32.mrb[0].mxu0
      %v1331 = vadd.f32 0.0, %v1330
      %v1332 = vpop.f32.mrb[0].mxu0
      %1333 = vdwg.mxu0
      %v1334 = vadd.f32 %v1170, %v1260
      %v1335 = vadd.f32 %v1171, %v1262
      %v1336 = vadd.f32 %v1172, %v1331
      %s1337 = scalar_lea.vmem %s1, 56
      %v1338 = vld [vmem:[%s1337] sm:$0xff]
      %1339 = vrot.lane.b32.xlu0 %v198, 91
      %v1340 = vpop.permute.xlu0 %1339
      %1341 = vrot.lane.b32.xlu0 %v205, 91
      %v1342 = vpop.permute.xlu0 %1341
      %1343 = vrot.lane.b32.xlu0 %v199, 91
      %v1344 = vpop.permute.xlu0 %1343
      %vm1345 = vcmask 744448
      %v1346 = vsel %vm1345, %v1340, %v1342
      %v1347 = vsel %vm1345, %v1342, %v1344
      %v1349 = vsel %vm215, %v1338, 0
      %v1351 = vsel %vm219, %v1346, 0
      %v1353 = vsel %vm219, %v1347, 0
      %v1355 = vsel %vm219, %v1344, 0
      %1357 = vmatprep.subr.mxu0 %v1353
      %1358 = vmatpush1.msra.mxu0 %v1351
      %1359 = vmatprep.subr.mxu0 0.0
      %1360 = vmatpush1.msra.mxu0 0.0
      %1361 = vmatprep.subr.mxu0 0.0
      %1362 = vmatpush1.msra.mxu0 0.0
      %1363 = vmatprep.subr.mxu0 0.0
      %1364 = vmatpush1.msra.mxu0 0.0
      %1365 = vmatprep.subr.mxu0 0.0
      %1366 = vmatpush1.msra.mxu0 0.0
      %1367 = vmatprep.subr.mxu0 0.0
      %1368 = vmatpush1.msra.mxu0 0.0
      %1369 = vmatprep.subr.mxu0 0.0
      %1370 = vmatpush1.msra.mxu0 0.0
      %1371 = vmatprep.subr.mxu0 0.0
      %1372 = vmatpush1.msra.mxu0 0.0
      %1373 = vmatprep.subr.mxu0 0.0
      %1374 = vmatpush1.msra.mxu0 0.0
      %1375 = vmatprep.subr.mxu0 0.0
      %1376 = vmatpush1.msra.mxu0 0.0
      %1377 = vmatprep.subr.mxu0 0.0
      %1378 = vmatpush1.msra.mxu0 0.0
      %1379 = vmatprep.subr.mxu0 0.0
      %1380 = vmatpush1.msra.mxu0 0.0
      %1381 = vmatprep.subr.mxu0 0.0
      %1382 = vmatpush1.msra.mxu0 0.0
      %1383 = vmatprep.subr.mxu0 0.0
      %1384 = vmatpush1.msra.mxu0 0.0
      %1385 = vmatprep.subr.mxu0 0.0
      %1386 = vmatpush1.msra.mxu0 0.0
      %1387 = vmatprep.subr.mxu0 0.0
      %1388 = vmatpush1.msra.mxu0 0.0
      %1389 = vmatprep.subr.mxu0 0.0
      %1390 = vmatpush1.msra.mxu0 0.0
      %1391 = vmatprep.subr.mxu0 0.0
      %1392 = vmatpush1.msra.mxu0 0.0
      %1393 = vmatprep.subr.mxu0 0.0
      %1394 = vmatpush1.msra.mxu0 0.0
      %1395 = vmatprep.subr.mxu0 0.0
      %1396 = vmatpush1.msra.mxu0 0.0
      %1397 = vmatprep.subr.mxu0 0.0
      %1398 = vmatpush1.msra.mxu0 0.0
      %1399 = vmatprep.subr.mxu0 0.0
      %1400 = vmatpush1.msra.mxu0 0.0
      %1401 = vmatprep.subr.mxu0 0.0
      %1402 = vmatpush1.msra.mxu0 0.0
      %1403 = vmatprep.subr.mxu0 0.0
      %1404 = vmatpush1.msra.mxu0 0.0
      %1405 = vmatprep.subr.mxu0 0.0
      %1406 = vmatpush1.msra.mxu0 0.0
      %1407 = vmatprep.subr.mxu0 0.0
      %1408 = vmatpush1.msra.mxu0 0.0
      %1409 = vmatprep.subr.mxu0 0.0
      %1410 = vmatpush1.msra.mxu0 0.0
      %1411 = vmatprep.subr.mxu0 0.0
      %1412 = vmatpush1.msra.mxu0 0.0
      %1413 = vmatprep.subr.mxu0 0.0
      %1414 = vmatpush1.msra.mxu0 0.0
      %1415 = vmatprep.subr.mxu0 0.0
      %1416 = vmatpush1.msra.mxu0 0.0
      %1417 = vmatprep.subr.mxu0 0.0
      %1418 = vmatpush1.msra.mxu0 0.0
      %1419 = vmatprep.subr.mxu0 0.0
      %1420 = vmatpush1.msra.mxu0 0.0
      %1421 = vmatprep.mubr.f32.mxu0 0.0
      %1422 = vmatmul.mubr.f32.gmra.mrb[0].mxu0 %v1349
      %v1423 = vpop.f32.mrb[0].mxu0
      %v1424 = vadd.f32 0.0, %v1423
      %v1425 = vpop.f32.mrb[0].mxu0
      %v1426 = vadd.f32 0.0, %v1425
      %1427 = vdwg.mxu0
      %1428 = vmatprep.subr.mxu0 0.0
      %1429 = vmatpush1.msra.mxu0 %v1355
      %1430 = vmatprep.subr.mxu0 0.0
      %1431 = vmatpush1.msra.mxu0 0.0
      %1432 = vmatprep.subr.mxu0 0.0
      %1433 = vmatpush1.msra.mxu0 0.0
      %1434 = vmatprep.subr.mxu0 0.0
      %1435 = vmatpush1.msra.mxu0 0.0
      %1436 = vmatprep.subr.mxu0 0.0
      %1437 = vmatpush1.msra.mxu0 0.0
      %1438 = vmatprep.subr.mxu0 0.0
      %1439 = vmatpush1.msra.mxu0 0.0
      %1440 = vmatprep.subr.mxu0 0.0
      %1441 = vmatpush1.msra.mxu0 0.0
      %1442 = vmatprep.subr.mxu0 0.0
      %1443 = vmatpush1.msra.mxu0 0.0
      %1444 = vmatprep.subr.mxu0 0.0
      %1445 = vmatpush1.msra.mxu0 0.0
      %1446 = vmatprep.subr.mxu0 0.0
      %1447 = vmatpush1.msra.mxu0 0.0
      %1448 = vmatprep.subr.mxu0 0.0
      %1449 = vmatpush1.msra.mxu0 0.0
      %1450 = vmatprep.subr.mxu0 0.0
      %1451 = vmatpush1.msra.mxu0 0.0
      %1452 = vmatprep.subr.mxu0 0.0
      %1453 = vmatpush1.msra.mxu0 0.0
      %1454 = vmatprep.subr.mxu0 0.0
      %1455 = vmatpush1.msra.mxu0 0.0
      %1456 = vmatprep.subr.mxu0 0.0
      %1457 = vmatpush1.msra.mxu0 0.0
      %1458 = vmatprep.subr.mxu0 0.0
      %1459 = vmatpush1.msra.mxu0 0.0
      %1460 = vmatprep.subr.mxu0 0.0
      %1461 = vmatpush1.msra.mxu0 0.0
      %1462 = vmatprep.subr.mxu0 0.0
      %1463 = vmatpush1.msra.mxu0 0.0
      %1464 = vmatprep.subr.mxu0 0.0
      %1465 = vmatpush1.msra.mxu0 0.0
      %1466 = vmatprep.subr.mxu0 0.0
      %1467 = vmatpush1.msra.mxu0 0.0
      %1468 = vmatprep.subr.mxu0 0.0
      %1469 = vmatpush1.msra.mxu0 0.0
      %1470 = vmatprep.subr.mxu0 0.0
      %1471 = vmatpush1.msra.mxu0 0.0
      %1472 = vmatprep.subr.mxu0 0.0
      %1473 = vmatpush1.msra.mxu0 0.0
      %1474 = vmatprep.subr.mxu0 0.0
      %1475 = vmatpush1.msra.mxu0 0.0
      %1476 = vmatprep.subr.mxu0 0.0
      %1477 = vmatpush1.msra.mxu0 0.0
      %1478 = vmatprep.subr.mxu0 0.0
      %1479 = vmatpush1.msra.mxu0 0.0
      %1480 = vmatprep.subr.mxu0 0.0
      %1481 = vmatpush1.msra.mxu0 0.0
      %1482 = vmatprep.subr.mxu0 0.0
      %1483 = vmatpush1.msra.mxu0 0.0
      %1484 = vmatprep.subr.mxu0 0.0
      %1485 = vmatpush1.msra.mxu0 0.0
      %1486 = vmatprep.subr.mxu0 0.0
      %1487 = vmatpush1.msra.mxu0 0.0
      %1488 = vmatprep.subr.mxu0 0.0
      %1489 = vmatpush1.msra.mxu0 0.0
      %1490 = vmatprep.subr.mxu0 0.0
      %1491 = vmatpush1.msra.mxu0 0.0
      %1492 = vmatprep.mubr.f32.mxu0 0.0
      %1493 = vmatmul.mubr.f32.gmra.mrb[0].mxu0 %v1349
      %v1494 = vpop.f32.mrb[0].mxu0
      %v1495 = vadd.f32 0.0, %v1494
      %v1496 = vpop.f32.mrb[0].mxu0
      %1497 = vdwg.mxu0
      %v1498 = vadd.f32 %v1334, %v1424
      %v1499 = vadd.f32 %v1335, %v1426
      %v1500 = vadd.f32 %v1336, %v1495
      %s1501 = scalar_lea.vmem %s1, 64
      %v1502 = vld [vmem:[%s1501] sm:$0xff]
      %1503 = vrot.lane.b32.xlu0 %v198, 90
      %v1504 = vpop.permute.xlu0 %1503
      %1505 = vrot.lane.b32.xlu0 %v205, 90
      %v1506 = vpop.permute.xlu0 %1505
      %1507 = vrot.lane.b32.xlu0 %v199, 90
      %v1508 = vpop.permute.xlu0 %1507
      %vm1509 = vcmask 736256
      %v1510 = vsel %vm1509, %v1504, %v1506
      %v1511 = vsel %vm1509, %v1506, %v1508
      %v1513 = vsel %vm215, %v1502, 0
      %v1515 = vsel %vm219, %v1510, 0
      %v1517 = vsel %vm219, %v1511, 0
      %v1519 = vsel %vm219, %v1508, 0
      %1521 = vmatprep.subr.mxu0 %v1517
      %1522 = vmatpush1.msra.mxu0 %v1515
      %1523 = vmatprep.subr.mxu0 0.0
      %1524 = vmatpush1.msra.mxu0 0.0
      %1525 = vmatprep.subr.mxu0 0.0
      %1526 = vmatpush1.msra.mxu0 0.0
      %1527 = vmatprep.subr.mxu0 0.0
      %1528 = vmatpush1.msra.mxu0 0.0
      %1529 = vmatprep.subr.mxu0 0.0
      %1530 = vmatpush1.msra.mxu0 0.0
      %1531 = vmatprep.subr.mxu0 0.0
      %1532 = vmatpush1.msra.mxu0 0.0
      %1533 = vmatprep.subr.mxu0 0.0
      %1534 = vmatpush1.msra.mxu0 0.0
      %1535 = vmatprep.subr.mxu0 0.0
      %1536 = vmatpush1.msra.mxu0 0.0
      %1537 = vmatprep.subr.mxu0 0.0
      %1538 = vmatpush1.msra.mxu0 0.0
      %1539 = vmatprep.subr.mxu0 0.0
      %1540 = vmatpush1.msra.mxu0 0.0
      %1541 = vmatprep.subr.mxu0 0.0
      %1542 = vmatpush1.msra.mxu0 0.0
      %1543 = vmatprep.subr.mxu0 0.0
      %1544 = vmatpush1.msra.mxu0 0.0
      %1545 = vmatprep.subr.mxu0 0.0
      %1546 = vmatpush1.msra.mxu0 0.0
      %1547 = vmatprep.subr.mxu0 0.0
      %1548 = vmatpush1.msra.mxu0 0.0
      %1549 = vmatprep.subr.mxu0 0.0
      %1550 = vmatpush1.msra.mxu0 0.0
      %1551 = vmatprep.subr.mxu0 0.0
      %1552 = vmatpush1.msra.mxu0 0.0
      %1553 = vmatprep.subr.mxu0 0.0
      %1554 = vmatpush1.msra.mxu0 0.0
      %1555 = vmatprep.subr.mxu0 0.0
      %1556 = vmatpush1.msra.mxu0 0.0
      %1557 = vmatprep.subr.mxu0 0.0
      %1558 = vmatpush1.msra.mxu0 0.0
      %1559 = vmatprep.subr.mxu0 0.0
      %1560 = vmatpush1.msra.mxu0 0.0
      %1561 = vmatprep.subr.mxu0 0.0
      %1562 = vmatpush1.msra.mxu0 0.0
      %1563 = vmatprep.subr.mxu0 0.0
      %1564 = vmatpush1.msra.mxu0 0.0
      %1565 = vmatprep.subr.mxu0 0.0
      %1566 = vmatpush1.msra.mxu0 0.0
      %1567 = vmatprep.subr.mxu0 0.0
      %1568 = vmatpush1.msra.mxu0 0.0
      %1569 = vmatprep.subr.mxu0 0.0
      %1570 = vmatpush1.msra.mxu0 0.0
      %1571 = vmatprep.subr.mxu0 0.0
      %1572 = vmatpush1.msra.mxu0 0.0
      %1573 = vmatprep.subr.mxu0 0.0
      %1574 = vmatpush1.msra.mxu0 0.0
      %1575 = vmatprep.subr.mxu0 0.0
      %1576 = vmatpush1.msra.mxu0 0.0
      %1577 = vmatprep.subr.mxu0 0.0
      %1578 = vmatpush1.msra.mxu0 0.0
      %1579 = vmatprep.subr.mxu0 0.0
      %1580 = vmatpush1.msra.mxu0 0.0
      %1581 = vmatprep.subr.mxu0 0.0
      %1582 = vmatpush1.msra.mxu0 0.0
      %1583 = vmatprep.subr.mxu0 0.0
      %1584 = vmatpush1.msra.mxu0 0.0
      %1585 = vmatprep.mubr.f32.mxu0 0.0
      %1586 = vmatmul.mubr.f32.gmra.mrb[0].mxu0 %v1513
      %v1587 = vpop.f32.mrb[0].mxu0
      %v1588 = vadd.f32 0.0, %v1587
      %v1589 = vpop.f32.mrb[0].mxu0
      %v1590 = vadd.f32 0.0, %v1589
      %1591 = vdwg.mxu0
      %1592 = vmatprep.subr.mxu0 0.0
      %1593 = vmatpush1.msra.mxu0 %v1519
      %1594 = vmatprep.subr.mxu0 0.0
      %1595 = vmatpush1.msra.mxu0 0.0
      %1596 = vmatprep.subr.mxu0 0.0
      %1597 = vmatpush1.msra.mxu0 0.0
      %1598 = vmatprep.subr.mxu0 0.0
      %1599 = vmatpush1.msra.mxu0 0.0
      %1600 = vmatprep.subr.mxu0 0.0
      %1601 = vmatpush1.msra.mxu0 0.0
      %1602 = vmatprep.subr.mxu0 0.0
      %1603 = vmatpush1.msra.mxu0 0.0
      %1604 = vmatprep.subr.mxu0 0.0
      %1605 = vmatpush1.msra.mxu0 0.0
      %1606 = vmatprep.subr.mxu0 0.0
      %1607 = vmatpush1.msra.mxu0 0.0
      %1608 = vmatprep.subr.mxu0 0.0
      %1609 = vmatpush1.msra.mxu0 0.0
      %1610 = vmatprep.subr.mxu0 0.0
      %1611 = vmatpush1.msra.mxu0 0.0
      %1612 = vmatprep.subr.mxu0 0.0
      %1613 = vmatpush1.msra.mxu0 0.0
      %1614 = vmatprep.subr.mxu0 0.0
      %1615 = vmatpush1.msra.mxu0 0.0
      %1616 = vmatprep.subr.mxu0 0.0
      %1617 = vmatpush1.msra.mxu0 0.0
      %1618 = vmatprep.subr.mxu0 0.0
      %1619 = vmatpush1.msra.mxu0 0.0
      %1620 = vmatprep.subr.mxu0 0.0
      %1621 = vmatpush1.msra.mxu0 0.0
      %1622 = vmatprep.subr.mxu0 0.0
      %1623 = vmatpush1.msra.mxu0 0.0
      %1624 = vmatprep.subr.mxu0 0.0
      %1625 = vmatpush1.msra.mxu0 0.0
      %1626 = vmatprep.subr.mxu0 0.0
      %1627 = vmatpush1.msra.mxu0 0.0
      %1628 = vmatprep.subr.mxu0 0.0
      %1629 = vmatpush1.msra.mxu0 0.0
      %1630 = vmatprep.subr.mxu0 0.0
      %1631 = vmatpush1.msra.mxu0 0.0
      %1632 = vmatprep.subr.mxu0 0.0
      %1633 = vmatpush1.msra.mxu0 0.0
      %1634 = vmatprep.subr.mxu0 0.0
      %1635 = vmatpush1.msra.mxu0 0.0
      %1636 = vmatprep.subr.mxu0 0.0
      %1637 = vmatpush1.msra.mxu0 0.0
      %1638 = vmatprep.subr.mxu0 0.0
      %1639 = vmatpush1.msra.mxu0 0.0
      %1640 = vmatprep.subr.mxu0 0.0
      %1641 = vmatpush1.msra.mxu0 0.0
      %1642 = vmatprep.subr.mxu0 0.0
      %1643 = vmatpush1.msra.mxu0 0.0
      %1644 = vmatprep.subr.mxu0 0.0
      %1645 = vmatpush1.msra.mxu0 0.0
      %1646 = vmatprep.subr.mxu0 0.0
      %1647 = vmatpush1.msra.mxu0 0.0
      %1648 = vmatprep.subr.mxu0 0.0
      %1649 = vmatpush1.msra.mxu0 0.0
      %1650 = vmatprep.subr.mxu0 0.0
      %1651 = vmatpush1.msra.mxu0 0.0
      %1652 = vmatprep.subr.mxu0 0.0
      %1653 = vmatpush1.msra.mxu0 0.0
      %1654 = vmatprep.subr.mxu0 0.0
      %1655 = vmatpush1.msra.mxu0 0.0
      %1656 = vmatprep.mubr.f32.mxu0 0.0
      %1657 = vmatmul.mubr.f32.gmra.mrb[0].mxu0 %v1513
      %v1658 = vpop.f32.mrb[0].mxu0
      %v1659 = vadd.f32 0.0, %v1658
      %v1660 = vpop.f32.mrb[0].mxu0
      %1661 = vdwg.mxu0
      %v1662 = vadd.f32 %v1498, %v1588
      %v1663 = vadd.f32 %v1499, %v1590
      %v1664 = vadd.f32 %v1500, %v1659
      %v1665 = vld [vmem:[%s2] sm:$0xff]
      %1667 = vset.pattern.permute.xlu0 0
      %1668 = vperm.xlu0 %1667, %v1665
      %v1669 = vpop.permute.xlu0 %1668
      %v1671 = vmul.f32 %v1662, %v1669
      %v1672 = vmul.f32 %v1663, %v1669
      %v1673 = vmul.f32 %v1664, %v1669
      %v1674 = vld [vmem:[%s3] sm:$0xff]
      %1676 = vset.pattern.permute.xlu0 0
      %1677 = vperm.xlu0 %1676, %v1674
      %v1678 = vpop.permute.xlu0 %1677
      %v1680 = vadd.f32 %v1671, %v1678
      %v1681 = vadd.f32 %v1672, %v1678
      %v1682 = vadd.f32 %v1673, %v1678
      %v1683 = vmax.f32 %v1680, 0.0
      %v1684 = vmax.f32 %v1681, 0.0
      %v1685 = vmax.f32 %v1682, 0.0
      %1686 = vst [vmem:[%s197] sm:$0xff] %v1683
      %1687 = vst [vmem:[%s197 + $0x8] sm:$0xff] %v1684
      %vm1688 = vcmask 244736
      %1689 = vst.msk [vmem:[%s197 + $0x10] sm:$0xff] %vm1688, %v1685
      %p1690 = scmp.lt.s32.totalorder %s15, 1
      %s1691 = scalar_select %p1690, %s15, 1
      %s1692 = smul.addr %s1691, 3
      %s1693 = smul.addr %s1692, 8
      %s1694 = scalar_lea.vmem %s4, %s1693
      // Predicated region
      $region37: #{custom_conv2d_forward.1} parent=35 // pred_check
        %p1695 = pneg %p122
      $region38: #{custom_conv2d_forward.1} parent=35 // pred_check_branch
        %1697 = sbr.rel (%p1695) target = $region40
      $region39: #{custom_conv2d_forward.1} parent=35 // pred_region
        _
      $region40: #{custom_conv2d_forward.1} parent=35 // pred_fallthru
        _
    $region36: #{custom_conv2d_forward.1} parent=5 // pred_fallthru
      _
    %p1698 = scmp.le.s32.totalorder 2, %s10
    // Predicated region
    $region41: #{custom_conv2d_forward.1} parent=5 // pred_check
      %p1699 = pneg %p1698
    $region42: #{custom_conv2d_forward.1} parent=5 // pred_check_branch
      %1701 = sbr.rel (%p1699) target = $region44
    $region43: #{custom_conv2d_forward.1} parent=5 // pred_region
      %s1702 = ssub.s32 %s10, 2
      // Predicated region
      $region45: #{custom_conv2d_forward.1} parent=43 // pred_check
        %p1703 = pneg %p128
      $region46: #{custom_conv2d_forward.1} parent=43 // pred_check_branch
        %1705 = sbr.rel (%p1703) target = $region48
      $region47: #{custom_conv2d_forward.1} parent=43 // pred_region
        %p1706 = scmp.lt.s32.totalorder %s16, 1
        %s1707 = scalar_select %p1706, %s16, 1
        %s1708 = smul.addr %s1707, 3
        %s1709 = smul.addr %s1708, 8
        %s1710 = scalar_lea.vmem %s4, %s1709
      $region48: #{custom_conv2d_forward.1} parent=43 // pred_fallthru
        _
    $region44: #{custom_conv2d_forward.1} parent=5 // pred_fallthru
      _
  $region6: #{custom_conv2d_forward.1} parent=0 // loop_footer
    %s14 = sadd.s32 1, %s10
  $region7: #{custom_conv2d_forward.1} parent=0 // loop_footer_branch
    %9 = sbr.rel target = $region3
  $region8: #{custom_conv2d_forward.1} parent=0 // loop_exit
    _

</llo_original>
